<compile_context>
chip_gen: v5e
topology: v5e:2x2
jax: 0.10.0
libtpu: 0.0.40
codegen_flags: <defaults>
</compile_context>

<pallas_src>
import functools

import jax
import jax.numpy as jnp
from jax.experimental import pallas as pl
from jax.experimental.pallas import tpu as pltpu


NUM_BLOCKS = 3
LN_EPS = 1e-5


def _multiblocks_kernel(x_ref, w_ref, b_ref, ln_ref, o_ref, *,
                        num_blocks: int, eps: float):
    """Fused: sequential residual-MLP blocks followed by LayerNorm.

    x_ref:  (TM, D)              current row-tile of the (M_pad, D) slab
    w_ref:  (num_blocks, D, D)   per-block weights (bf16, resident)
    b_ref:  (num_blocks, 1, D)   per-block biases (f32, resident)
    ln_ref: (2, D)               LayerNorm [gamma; beta] (f32, resident)
    o_ref:  (TM, D)              output row-tile
    """
    # Keep all VPU (elementwise) math in f32; only the MXU sees bf16 operands.
    x = x_ref[...].astype(jnp.float32)                      # (TM, D)
    ln = ln_ref[...].astype(jnp.float32)                    # hoisted
    gamma, beta = ln[0:1, :], ln[1:2, :]
    mxu_dtype = w_ref.dtype                                  # bf16

    # num_blocks is small and static -> unrolled python loop.
    # If num_blocks grows (>~4), switch to lax.fori_loop with dynamic
    # w_ref[blk] indexing to bound vreg live ranges and avoid VMEM spills.
    for blk in range(num_blocks):
        w = w_ref[blk]                                       # (D, D) bf16 -> MXU
        bias = b_ref[blk]                                    # (1, D) f32
        h = jnp.dot(x.astype(mxu_dtype), w,
                    preferred_element_type=jnp.float32) + bias
        x = x + jnp.maximum(h, 0.0)                          # residual + ReLU

    # Final LayerNorm over the feature axis (f32 throughout).
    mean = jnp.mean(x, axis=-1, keepdims=True)
    centered = x - mean
    var = jnp.mean(centered * centered, axis=-1, keepdims=True)
    y = centered * jax.lax.rsqrt(var + eps) * gamma + beta

    o_ref[...] = y.astype(o_ref.dtype)


def _round_up(x: int, m: int) -> int:
    return ((x + m - 1) // m) * m


def _tpu_info():
    """Best-effort (num_tensorcores_per_chip, vmem_capacity_bytes).

    Falls back to conservative defaults (1 TC, 64 MiB) if the query is not
    available, so tiling/VMEM choices stay safe on every generation.
    """
    n_tc, vmem_cap = 1, 64 << 20
    try:
        info = pltpu.get_tpu_info()
        for name in ("vmem_capacity_bytes", "vmem_bytes", "vmem_size_bytes"):
            v = getattr(info, name, None)
            if v:
                vmem_cap = int(v)
                break
        for name in ("num_cores", "tensorcore_count", "cores_per_chip"):
            v = getattr(info, name, None)
            if v:
                n_tc = int(v)
                break
    except Exception:
        pass
    if n_tc <= 1:
        try:
            kind = jax.devices()[0].device_kind.lower()
            if "7" in kind:          # v7x: 2 TensorCores/chip, 64 MiB VMEM/TC
                n_tc = 2
                vmem_cap = min(vmem_cap, 64 << 20)
        except Exception:
            pass
    return max(1, n_tc), vmem_cap


def _choose_tiling(m: int, *, target: int = 1024, min_grid_steps: int = 1):
    """Pick (row_tile, padded_rows).

    Prefers the largest exact multiple-of-8 divisor <= target with at least
    `min_grid_steps` grid steps (so both v7x TCs get work); otherwise pads M
    up to a multiple of a large tile instead of one giant full-slab tile.
    """
    target = max(8, (target // 8) * 8)
    best = None
    for cand in (2048, 1024, 512, 256, 128, 64, 32, 16, 8):
        if cand > target or m % cand:
            continue
        if m // cand >= min_grid_steps:
            best = cand
            break
    if best is not None and (best >= 256 or best * min_grid_steps >= m):
        return best, m
    # No large exact divisor: pad the row dimension (tail rows are zeros and
    # sliced off after the call).
    tm = min(target, _round_up(max(pl.cdiv(m, max(min_grid_steps, 1)), 8), 8))
    return tm, _round_up(m, tm)


def _call_pallas(x2d, w, b, ln, *, tm, grid_rows, nb, d, vmem_limit, cost,
                 single_buffer_params):
    """Build and invoke the pallas_call (optionally Buffered(1) params)."""
    pm = {"pipeline_mode": pl.Buffered(1)} if single_buffer_params else {}
    kernel = functools.partial(_multiblocks_kernel, num_blocks=nb, eps=LN_EPS)
    return pl.pallas_call(
        kernel,
        out_shape=jax.ShapeDtypeStruct(x2d.shape, x2d.dtype),
        grid_spec=pltpu.PrefetchScalarGridSpec(
            num_scalar_prefetch=0,
            grid=(grid_rows,),
            in_specs=[
                pl.BlockSpec((tm, d), lambda i: (i, 0)),               # x tile
                pl.BlockSpec((nb, d, d), lambda i: (0, 0, 0), **pm),   # weights
                pl.BlockSpec((nb, 1, d), lambda i: (0, 0, 0), **pm),   # biases
                pl.BlockSpec((2, d), lambda i: (0, 0), **pm),          # gamma/beta
            ],
            out_specs=pl.BlockSpec((tm, d), lambda i: (i, 0)),
        ),
        compiler_params=pltpu.CompilerParams(
            dimension_semantics=("parallel",),
            vmem_limit_bytes=int(vmem_limit),
        ),
        cost_estimate=cost,
        # Each input row-tile is read exactly once before its output tile is
        # written, so the slab can be aliased (full benefit needs a donating
        # jit at the model level; otherwise XLA inserts a defensive copy).
        input_output_aliases={0: 0},
    )(x2d, w, b, ln)


def multiblocks_forward(x, pos_enc, mask, params, *, tm=None, chunk_mask=None,
                        io_dtype=None):
    """Pallas implementation of MultiBlocks.forward.

    Args:
        x:        (B, T, D) input sequences.
        pos_enc:  positional embedding sequences (passed through unchanged).
        mask:     (B, T) source mask (passed through unchanged).
        params:   dict with 'w' (NB, D, D) bf16, 'b' (NB, 1, D) f32,
                  'ln' (2, D) f32 = stacked [gamma; beta].
        tm:       optional row-tile override (multiple of 8).
        io_dtype: activation I/O dtype for the HBM slab (default: x.dtype).
                  Use jnp.bfloat16 when the surrounding model tolerates it:
                  the kernel is HBM-bandwidth bound and this halves traffic.
    Returns:
        (B, T, D) output sequences in io_dtype.
    """
    # TODO(synk): real espnet blocks consume pos_enc / mask / chunk_mask; the
    # synthetic residual-MLP blocks here pass them through untouched.
    del pos_enc, mask, chunk_mask
    B, T, D = x.shape
    M = B * T
    io_dtype = jnp.dtype(x.dtype if io_dtype is None else io_dtype)

    w, b, ln = params["w"], params["b"], params["ln"]
    nb = w.shape[0]

    n_tc, vmem_cap = _tpu_info()

    if tm is None:
        # Single-TC chips (v5e/v6e): no forced multi-step grid.  v7x: >= 2
        # steps so both TensorCores get work (large M gets many steps anyway
        # because the tile is capped at 1024 rows).
        tm, m_pad = _choose_tiling(M, target=1024, min_grid_steps=n_tc)
    else:
        assert tm % 8 == 0, "row tile must be a multiple of 8"
        m_pad = _round_up(M, tm)

    x2d = x.reshape(M, D).astype(io_dtype)
    if m_pad != M:
        x2d = jnp.pad(x2d, ((0, m_pad - M), (0, 0)))
    grid_rows = m_pad // tm

    # VMEM budget: double-buffered in/out io tiles + live f32 temporaries in
    # the kernel body + resident params (worst case double-buffered, in case
    # Buffered(1) is unavailable) + slack, capped per generation.
    io_item = io_dtype.itemsize
    param_bytes = w.nbytes + b.nbytes + ln.nbytes
    need = (2 * 2 * tm * D * io_item        # in + out tiles, double-buffered
            + 6 * tm * D * 4                # live f32 intermediates
            + 2 * param_bytes               # resident params (worst case)
            + (4 << 20))                    # slack
    gen_cap = min(48 << 20, (vmem_cap * 5) // 8)   # ~40 MiB on 64 MiB/TC v7x
    vmem_limit = int(min(gen_cap, max(need, 16 << 20)))

    cost = pl.CostEstimate(
        flops=2 * m_pad * D * D * nb + 8 * m_pad * D,
        transcendentals=m_pad,                       # rsqrt per row
        bytes_accessed=2 * m_pad * D * io_item + param_bytes,
    )

    def call(single_buffer_params):
        return _call_pallas(x2d, w, b, ln, tm=tm, grid_rows=grid_rows,
                            nb=nb, d=D, vmem_limit=vmem_limit, cost=cost,
                            single_buffer_params=single_buffer_params)

    try:
        out2d = call(True)      # params grid-invariant -> single pipeline buffer
    except Exception:
        out2d = call(False)     # jax version without Buffered(1) support here

    if m_pad != M:
        out2d = out2d[:M]
    return out2d.reshape(B, T, D)


def multiblocks_reference(x, params, *, io_dtype=None):
    """Pure-JAX reference mirroring the kernel's dtype handling exactly
    (io_dtype boundary casts, bf16 MXU operands, f32 accumulation, f32
    elementwise + LayerNorm, io_dtype output)."""
    io_dtype = jnp.dtype(x.dtype if io_dtype is None else io_dtype)
    w, b, ln = params["w"], params["b"], params["ln"]
    xf = x.astype(io_dtype).astype(jnp.float32)
    for blk in range(w.shape[0]):
        h = jnp.dot(xf.astype(w.dtype), w[blk],
                    preferred_element_type=jnp.float32)
        h = h + b[blk].astype(jnp.float32)
        xf = xf + jnp.maximum(h, 0.0)
    mean = jnp.mean(xf, axis=-1, keepdims=True)
    var = jnp.mean((xf - mean) ** 2, axis=-1, keepdims=True)
    xn = (xf - mean) * jax.lax.rsqrt(var + LN_EPS)
    y = xn * ln[0].astype(jnp.float32) + ln[1].astype(jnp.float32)
    return y.astype(io_dtype)


def init_params(key, num_blocks, d):
    kw, kb = jax.random.split(key)
    # Weights stored in bf16: feeds the MXU at its bf16 peak and halves
    # resident-parameter VMEM + HBM traffic.  Biases stay f32 (tiny) for
    # fidelity to the PyTorch module.
    w = (0.05 * jax.random.normal(kw, (num_blocks, d, d),
                                  jnp.float32)).astype(jnp.bfloat16)
    b = 0.05 * jax.random.normal(kb, (num_blocks, 1, d), jnp.float32)
    # LayerNorm weight/bias packed into one (2, D) f32 array: [gamma; beta].
    ln = jnp.stack([jnp.ones((d,), jnp.float32), jnp.zeros((d,), jnp.float32)])
    return {"w": w, "b": b, "ln": ln}


if __name__ == "__main__":
    # Lane-dense shapes: D=128 fills all 128 vreg lanes, so output stores are
    # unmasked vst.  (On v7x, D=128 only half-fills the 256x256 MXU; that is a
    # property of output_size, documented rather than worked around here.)
    B, T, D = 2, 64, 128
    key = jax.random.PRNGKey(0)
    kx, kp, ke = jax.random.split(key, 3)

    x = jax.random.normal(kx, (B, T, D), jnp.float32)
    pos_enc = jax.random.normal(ke, (B, 2 * (T - 1), D), jnp.float32)
    mask = jnp.ones((B, T), jnp.bool_)
    params = init_params(kp, NUM_BLOCKS, D)

    # Recommended path: bf16 activation I/O (halves the HBM traffic of the
    # bandwidth-bound (M, D) slab); all in-kernel math stays f32.
    out_bf16 = multiblocks_forward(x, pos_enc, mask, params,
                                   io_dtype=jnp.bfloat16)
    out_bf16 = jax.block_until_ready(out_bf16)
    ref_bf16 = multiblocks_reference(x, params, io_dtype=jnp.bfloat16)
    assert out_bf16.shape == (B, T, D) and out_bf16.dtype == jnp.bfloat16
    assert jnp.allclose(out_bf16.astype(jnp.float32),
                        ref_bf16.astype(jnp.float32),
                        atol=2e-2, rtol=2e-2), "bf16-I/O mismatch vs reference"

    # Full-precision I/O path (matches the input dtype).
    out_f32 = multiblocks_forward(x, pos_enc, mask, params)
    out_f32 = jax.block_until_ready(out_f32)
    ref_f32 = multiblocks_reference(x, params)
    assert out_f32.shape == (B, T, D) and out_f32.dtype == x.dtype
    assert jnp.allclose(out_f32, ref_f32, atol=2e-3, rtol=2e-3), \
        "f32-I/O mismatch vs reference"

    print("KERNEL_OK")
</pallas_src>

<mosaic_0001>
module attributes {stable_mosaic.version = 11 : i64} {
  func.func @_multiblocks_kernel(%arg0: i32, %arg1: memref<128x128xbf16, #tpu.memory_space<vmem>>, %arg2: memref<3x128x128xbf16, #tpu.memory_space<vmem>>, %arg3: memref<3x1x128xf32, #tpu.memory_space<vmem>>, %arg4: memref<2x128xf32, #tpu.memory_space<vmem>>, %arg5: memref<128x128xbf16, #tpu.memory_space<vmem>>) attributes {dimension_semantics = [#tpu.dimension_semantics<parallel>], iteration_bounds = array<i64: 1>, scalar_prefetch = 0 : i64, scratch_operands = 0 : i64, tpu.core_type = #tpu.core_type<tc>, window_params = [{transform_indices = @transform_0, window_bounds = array<i64: 128, 128>}, {pipeline_mode = #tpu.pipeline_mode<synchronous>, transform_indices = @transform_1, window_bounds = array<i64: 3, 128, 128>}, {pipeline_mode = #tpu.pipeline_mode<synchronous>, transform_indices = @transform_2, window_bounds = array<i64: 3, 1, 128>}, {pipeline_mode = #tpu.pipeline_mode<synchronous>, transform_indices = @transform_3, window_bounds = array<i64: 2, 128>}, {transform_indices = @transform_4, window_bounds = array<i64: 128, 128>}]} {
    %c0 = arith.constant 0 : index
    %c0_0 = arith.constant 0 : index
    %0 = vector.load %arg1[%c0, %c0_0] : memref<128x128xbf16, #tpu.memory_space<vmem>>, vector<128x128xbf16>
    %1 = arith.extf %0 : vector<128x128xbf16> to vector<128x128xf32>
    %c0_1 = arith.constant 0 : index
    %c0_2 = arith.constant 0 : index
    %2 = vector.load %arg4[%c0_1, %c0_2] : memref<2x128xf32, #tpu.memory_space<vmem>>, vector<2x128xf32>
    %3 = vector.extract_strided_slice %2 {offsets = [0, 0], sizes = [1, 128], strides = [1, 1]} : vector<2x128xf32> to vector<1x128xf32>
    %4 = vector.extract_strided_slice %2 {offsets = [1, 0], sizes = [1, 128], strides = [1, 1]} : vector<2x128xf32> to vector<1x128xf32>
    %c0_3 = arith.constant 0 : index
    %c0_4 = arith.constant 0 : index
    %c0_5 = arith.constant 0 : index
    %5 = vector.load %arg2[%c0_3, %c0_4, %c0_5] : memref<3x128x128xbf16, #tpu.memory_space<vmem>>, vector<1x128x128xbf16>
    %6 = vector.shape_cast %5 : vector<1x128x128xbf16> to vector<128x128xbf16>
    %c0_6 = arith.constant 0 : index
    %c0_7 = arith.constant 0 : index
    %c0_8 = arith.constant 0 : index
    %7 = vector.load %arg3[%c0_6, %c0_7, %c0_8] : memref<3x1x128xf32, #tpu.memory_space<vmem>>, vector<1x1x128xf32>
    %8 = vector.shape_cast %7 : vector<1x1x128xf32> to vector<1x128xf32>
    %9 = arith.truncf %1 : vector<128x128xf32> to vector<128x128xbf16>
    %cst = arith.constant dense<0.000000e+00> : vector<128x128xf32>
    %10 = tpu.matmul %9, %6, %cst {dimension_numbers = #tpu.dot_dimension_numbers<[1], [0], [0], [1], [0, 0, 1, 1], [], []>} : vector<128x128xbf16>, vector<128x128xbf16>, vector<128x128xf32> -> vector<128x128xf32>
    %11 = vector.broadcast %8 : vector<1x128xf32> to vector<128x128xf32>
    %12 = arith.addf %10, %11 : vector<128x128xf32>
    %cst_9 = arith.constant 0.000000e+00 : f32
    %13 = vector.broadcast %cst_9 : f32 to vector<128x128xf32>
    %14 = arith.maximumf %12, %13 : vector<128x128xf32>
    %15 = arith.addf %1, %14 : vector<128x128xf32>
    %c1 = arith.constant 1 : index
    %c0_10 = arith.constant 0 : index
    %c0_11 = arith.constant 0 : index
    %16 = vector.load %arg2[%c1, %c0_10, %c0_11] : memref<3x128x128xbf16, #tpu.memory_space<vmem>>, vector<1x128x128xbf16>
    %17 = vector.shape_cast %16 : vector<1x128x128xbf16> to vector<128x128xbf16>
    %c1_12 = arith.constant 1 : index
    %c0_13 = arith.constant 0 : index
    %c0_14 = arith.constant 0 : index
    %18 = vector.load %arg3[%c1_12, %c0_13, %c0_14] : memref<3x1x128xf32, #tpu.memory_space<vmem>>, vector<1x1x128xf32>
    %19 = vector.shape_cast %18 : vector<1x1x128xf32> to vector<1x128xf32>
    %20 = arith.truncf %15 : vector<128x128xf32> to vector<128x128xbf16>
    %cst_15 = arith.constant dense<0.000000e+00> : vector<128x128xf32>
    %21 = tpu.matmul %20, %17, %cst_15 {dimension_numbers = #tpu.dot_dimension_numbers<[1], [0], [0], [1], [0, 0, 1, 1], [], []>} : vector<128x128xbf16>, vector<128x128xbf16>, vector<128x128xf32> -> vector<128x128xf32>
    %22 = vector.broadcast %19 : vector<1x128xf32> to vector<128x128xf32>
    %23 = arith.addf %21, %22 : vector<128x128xf32>
    %cst_16 = arith.constant 0.000000e+00 : f32
    %24 = vector.broadcast %cst_16 : f32 to vector<128x128xf32>
    %25 = arith.maximumf %23, %24 : vector<128x128xf32>
    %26 = arith.addf %15, %25 : vector<128x128xf32>
    %c2 = arith.constant 2 : index
    %c0_17 = arith.constant 0 : index
    %c0_18 = arith.constant 0 : index
    %27 = vector.load %arg2[%c2, %c0_17, %c0_18] : memref<3x128x128xbf16, #tpu.memory_space<vmem>>, vector<1x128x128xbf16>
    %28 = vector.shape_cast %27 : vector<1x128x128xbf16> to vector<128x128xbf16>
    %c2_19 = arith.constant 2 : index
    %c0_20 = arith.constant 0 : index
    %c0_21 = arith.constant 0 : index
    %29 = vector.load %arg3[%c2_19, %c0_20, %c0_21] : memref<3x1x128xf32, #tpu.memory_space<vmem>>, vector<1x1x128xf32>
    %30 = vector.shape_cast %29 : vector<1x1x128xf32> to vector<1x128xf32>
    %31 = arith.truncf %26 : vector<128x128xf32> to vector<128x128xbf16>
    %cst_22 = arith.constant dense<0.000000e+00> : vector<128x128xf32>
    %32 = tpu.matmul %31, %28, %cst_22 {dimension_numbers = #tpu.dot_dimension_numbers<[1], [0], [0], [1], [0, 0, 1, 1], [], []>} : vector<128x128xbf16>, vector<128x128xbf16>, vector<128x128xf32> -> vector<128x128xf32>
    %33 = vector.broadcast %30 : vector<1x128xf32> to vector<128x128xf32>
    %34 = arith.addf %32, %33 : vector<128x128xf32>
    %cst_23 = arith.constant 0.000000e+00 : f32
    %35 = vector.broadcast %cst_23 : f32 to vector<128x128xf32>
    %36 = arith.maximumf %34, %35 : vector<128x128xf32>
    %37 = arith.addf %26, %36 : vector<128x128xf32>
    %cst_24 = arith.constant dense<0.000000e+00> : vector<128xf32>
    %38 = vector.multi_reduction <add>, %37, %cst_24 [1] : vector<128x128xf32> to vector<128xf32>
    %39 = vector.shape_cast %38 : vector<128xf32> to vector<128x1xf32>
    %cst_25 = arith.constant 1.280000e+02 : f32
    %40 = vector.broadcast %cst_25 : f32 to vector<128x1xf32>
    %41 = arith.divf %39, %40 : vector<128x1xf32>
    %42 = vector.broadcast %41 : vector<128x1xf32> to vector<128x128xf32>
    %43 = arith.subf %37, %42 : vector<128x128xf32>
    %44 = arith.mulf %43, %43 : vector<128x128xf32>
    %cst_26 = arith.constant dense<0.000000e+00> : vector<128xf32>
    %45 = vector.multi_reduction <add>, %44, %cst_26 [1] : vector<128x128xf32> to vector<128xf32>
    %46 = vector.shape_cast %45 : vector<128xf32> to vector<128x1xf32>
    %cst_27 = arith.constant 1.280000e+02 : f32
    %47 = vector.broadcast %cst_27 : f32 to vector<128x1xf32>
    %48 = arith.divf %46, %47 : vector<128x1xf32>
    %cst_28 = arith.constant 9.99999974E-6 : f32
    %49 = vector.broadcast %cst_28 : f32 to vector<128x1xf32>
    %50 = arith.addf %48, %49 : vector<128x1xf32>
    %51 = math.rsqrt %50 : vector<128x1xf32>
    %52 = vector.broadcast %51 : vector<128x1xf32> to vector<128x128xf32>
    %53 = arith.mulf %43, %52 : vector<128x128xf32>
    %54 = vector.broadcast %3 : vector<1x128xf32> to vector<128x128xf32>
    %55 = arith.mulf %53, %54 : vector<128x128xf32>
    %56 = vector.broadcast %4 : vector<1x128xf32> to vector<128x128xf32>
    %57 = arith.addf %55, %56 : vector<128x128xf32>
    %58 = arith.truncf %57 : vector<128x128xf32> to vector<128x128xbf16>
    %c0_29 = arith.constant 0 : index
    %c0_30 = arith.constant 0 : index
    %59 = vector.load %arg5[%c0_29, %c0_30] : memref<128x128xbf16, #tpu.memory_space<vmem>>, vector<128x128xbf16>
    tpu.vector_store %arg5[%c0_29, %c0_30], %58 {strides = array<i32>} : memref<128x128xbf16, #tpu.memory_space<vmem>>, vector<128x128xbf16>,
    return
  }
  func.func @transform_0(%arg0: i32) -> (i32, i32) {
    %c0_i32 = arith.constant 0 : i32
    %c0_i32_0 = arith.constant 0 : i32
    return %arg0, %c0_i32 : i32, i32
  }
  func.func @transform_1(%arg0: i32) -> (i32, i32, i32) {
    %c0_i32 = arith.constant 0 : i32
    %c0_i32_0 = arith.constant 0 : i32
    %c0_i32_1 = arith.constant 0 : i32
    %c0_i32_2 = arith.constant 0 : i32
    return %c0_i32, %c0_i32_0, %c0_i32_1 : i32, i32, i32
  }
  func.func @transform_2(%arg0: i32) -> (i32, i32, i32) {
    %c0_i32 = arith.constant 0 : i32
    %c0_i32_0 = arith.constant 0 : i32
    %c0_i32_1 = arith.constant 0 : i32
    %c0_i32_2 = arith.constant 0 : i32
    return %c0_i32, %c0_i32_0, %c0_i32_1 : i32, i32, i32
  }
  func.func @transform_3(%arg0: i32) -> (i32, i32) {
    %c0_i32 = arith.constant 0 : i32
    %c0_i32_0 = arith.constant 0 : i32
    %c0_i32_1 = arith.constant 0 : i32
    return %c0_i32, %c0_i32_0 : i32, i32
  }
  func.func @transform_4(%arg0: i32) -> (i32, i32) {
    %c0_i32 = arith.constant 0 : i32
    %c0_i32_0 = arith.constant 0 : i32
    return %arg0, %c0_i32 : i32, i32
  }
}

module attributes {stable_mosaic.version = 11 : i64} {
  func.func @_multiblocks_kernel(%arg0: i32, %arg1: memref<128x128xbf16, #tpu.memory_space<vmem>>, %arg2: memref<3x128x128xbf16, #tpu.memory_space<vmem>>, %arg3: memref<3x1x128xf32, #tpu.memory_space<vmem>>, %arg4: memref<2x128xf32, #tpu.memory_space<vmem>>, %arg5: memref<128x128xbf16, #tpu.memory_space<vmem>>) attributes {dimension_semantics = [#tpu.dimension_semantics<parallel>], iteration_bounds = array<i64: 1>, scalar_prefetch = 0 : i64, scratch_operands = 0 : i64, tpu.core_type = #tpu.core_type<tc>, window_params = [{transform_indices = @transform_0, window_bounds = array<i64: 128, 128>}, {pipeline_mode = #tpu.pipeline_mode<synchronous>, transform_indices = @transform_1, window_bounds = array<i64: 3, 128, 128>}, {pipeline_mode = #tpu.pipeline_mode<synchronous>, transform_indices = @transform_2, window_bounds = array<i64: 3, 1, 128>}, {pipeline_mode = #tpu.pipeline_mode<synchronous>, transform_indices = @transform_3, window_bounds = array<i64: 2, 128>}, {transform_indices = @transform_4, window_bounds = array<i64: 128, 128>}]} {
    %c0 = arith.constant 0 : index
    %c0_0 = arith.constant 0 : index
    %0 = vector.load %arg1[%c0, %c0_0] : memref<128x128xbf16, #tpu.memory_space<vmem>>, vector<128x128xbf16>
    %1 = arith.extf %0 : vector<128x128xbf16> to vector<128x128xf32>
    %c0_1 = arith.constant 0 : index
    %c0_2 = arith.constant 0 : index
    %2 = vector.load %arg4[%c0_1, %c0_2] : memref<2x128xf32, #tpu.memory_space<vmem>>, vector<2x128xf32>
    %3 = vector.extract_strided_slice %2 {offsets = [0, 0], sizes = [1, 128], strides = [1, 1]} : vector<2x128xf32> to vector<1x128xf32>
    %4 = vector.extract_strided_slice %2 {offsets = [1, 0], sizes = [1, 128], strides = [1, 1]} : vector<2x128xf32> to vector<1x128xf32>
    %c0_3 = arith.constant 0 : index
    %c0_4 = arith.constant 0 : index
    %c0_5 = arith.constant 0 : index
    %5 = vector.load %arg2[%c0_3, %c0_4, %c0_5] : memref<3x128x128xbf16, #tpu.memory_space<vmem>>, vector<1x128x128xbf16>
    %6 = vector.shape_cast %5 : vector<1x128x128xbf16> to vector<128x128xbf16>
    %c0_6 = arith.constant 0 : index
    %c0_7 = arith.constant 0 : index
    %c0_8 = arith.constant 0 : index
    %7 = vector.load %arg3[%c0_6, %c0_7, %c0_8] : memref<3x1x128xf32, #tpu.memory_space<vmem>>, vector<1x1x128xf32>
    %8 = vector.shape_cast %7 : vector<1x1x128xf32> to vector<1x128xf32>
    %9 = arith.truncf %1 : vector<128x128xf32> to vector<128x128xbf16>
    %cst = arith.constant dense<0.000000e+00> : vector<128x128xf32>
    %10 = tpu.matmul %9, %6, %cst {dimension_numbers = #tpu.dot_dimension_numbers<[1], [0], [0], [1], [0, 0, 1, 1], [], []>} : vector<128x128xbf16>, vector<128x128xbf16>, vector<128x128xf32> -> vector<128x128xf32>
    %11 = vector.broadcast %8 : vector<1x128xf32> to vector<128x128xf32>
    %12 = arith.addf %10, %11 : vector<128x128xf32>
    %cst_9 = arith.constant 0.000000e+00 : f32
    %13 = vector.broadcast %cst_9 : f32 to vector<128x128xf32>
    %14 = arith.maximumf %12, %13 : vector<128x128xf32>
    %15 = arith.addf %1, %14 : vector<128x128xf32>
    %c1 = arith.constant 1 : index
    %c0_10 = arith.constant 0 : index
    %c0_11 = arith.constant 0 : index
    %16 = vector.load %arg2[%c1, %c0_10, %c0_11] : memref<3x128x128xbf16, #tpu.memory_space<vmem>>, vector<1x128x128xbf16>
    %17 = vector.shape_cast %16 : vector<1x128x128xbf16> to vector<128x128xbf16>
    %c1_12 = arith.constant 1 : index
    %c0_13 = arith.constant 0 : index
    %c0_14 = arith.constant 0 : index
    %18 = vector.load %arg3[%c1_12, %c0_13, %c0_14] : memref<3x1x128xf32, #tpu.memory_space<vmem>>, vector<1x1x128xf32>
    %19 = vector.shape_cast %18 : vector<1x1x128xf32> to vector<1x128xf32>
    %20 = arith.truncf %15 : vector<128x128xf32> to vector<128x128xbf16>
    %cst_15 = arith.constant dense<0.000000e+00> : vector<128x128xf32>
    %21 = tpu.matmul %20, %17, %cst_15 {dimension_numbers = #tpu.dot_dimension_numbers<[1], [0], [0], [1], [0, 0, 1, 1], [], []>} : vector<128x128xbf16>, vector<128x128xbf16>, vector<128x128xf32> -> vector<128x128xf32>
    %22 = vector.broadcast %19 : vector<1x128xf32> to vector<128x128xf32>
    %23 = arith.addf %21, %22 : vector<128x128xf32>
    %cst_16 = arith.constant 0.000000e+00 : f32
    %24 = vector.broadcast %cst_16 : f32 to vector<128x128xf32>
    %25 = arith.maximumf %23, %24 : vector<128x128xf32>
    %26 = arith.addf %15, %25 : vector<128x128xf32>
    %c2 = arith.constant 2 : index
    %c0_17 = arith.constant 0 : index
    %c0_18 = arith.constant 0 : index
    %27 = vector.load %arg2[%c2, %c0_17, %c0_18] : memref<3x128x128xbf16, #tpu.memory_space<vmem>>, vector<1x128x128xbf16>
    %28 = vector.shape_cast %27 : vector<1x128x128xbf16> to vector<128x128xbf16>
    %c2_19 = arith.constant 2 : index
    %c0_20 = arith.constant 0 : index
    %c0_21 = arith.constant 0 : index
    %29 = vector.load %arg3[%c2_19, %c0_20, %c0_21] : memref<3x1x128xf32, #tpu.memory_space<vmem>>, vector<1x1x128xf32>
    %30 = vector.shape_cast %29 : vector<1x1x128xf32> to vector<1x128xf32>
    %31 = arith.truncf %26 : vector<128x128xf32> to vector<128x128xbf16>
    %cst_22 = arith.constant dense<0.000000e+00> : vector<128x128xf32>
    %32 = tpu.matmul %31, %28, %cst_22 {dimension_numbers = #tpu.dot_dimension_numbers<[1], [0], [0], [1], [0, 0, 1, 1], [], []>} : vector<128x128xbf16>, vector<128x128xbf16>, vector<128x128xf32> -> vector<128x128xf32>
    %33 = vector.broadcast %30 : vector<1x128xf32> to vector<128x128xf32>
    %34 = arith.addf %32, %33 : vector<128x128xf32>
    %cst_23 = arith.constant 0.000000e+00 : f32
    %35 = vector.broadcast %cst_23 : f32 to vector<128x128xf32>
    %36 = arith.maximumf %34, %35 : vector<128x128xf32>
    %37 = arith.addf %26, %36 : vector<128x128xf32>
    %cst_24 = arith.constant dense<0.000000e+00> : vector<128xf32>
    %38 = vector.multi_reduction <add>, %37, %cst_24 [1] : vector<128x128xf32> to vector<128xf32>
    %39 = vector.shape_cast %38 : vector<128xf32> to vector<128x1xf32>
    %cst_25 = arith.constant 1.280000e+02 : f32
    %40 = vector.broadcast %cst_25 : f32 to vector<128x1xf32>
    %41 = arith.divf %39, %40 : vector<128x1xf32>
    %42 = vector.broadcast %41 : vector<128x1xf32> to vector<128x128xf32>
    %43 = arith.subf %37, %42 : vector<128x128xf32>
    %44 = arith.mulf %43, %43 : vector<128x128xf32>
    %cst_26 = arith.constant dense<0.000000e+00> : vector<128xf32>
    %45 = vector.multi_reduction <add>, %44, %cst_26 [1] : vector<128x128xf32> to vector<128xf32>
    %46 = vector.shape_cast %45 : vector<128xf32> to vector<128x1xf32>
    %cst_27 = arith.constant 1.280000e+02 : f32
    %47 = vector.broadcast %cst_27 : f32 to vector<128x1xf32>
    %48 = arith.divf %46, %47 : vector<128x1xf32>
    %cst_28 = arith.constant 9.99999974E-6 : f32
    %49 = vector.broadcast %cst_28 : f32 to vector<128x1xf32>
    %50 = arith.addf %48, %49 : vector<128x1xf32>
    %51 = math.rsqrt %50 : vector<128x1xf32>
    %52 = vector.broadcast %51 : vector<128x1xf32> to vector<128x128xf32>
    %53 = arith.mulf %43, %52 : vector<128x128xf32>
    %54 = vector.broadcast %3 : vector<1x128xf32> to vector<128x128xf32>
    %55 = arith.mulf %53, %54 : vector<128x128xf32>
    %56 = vector.broadcast %4 : vector<1x128xf32> to vector<128x128xf32>
    %57 = arith.addf %55, %56 : vector<128x128xf32>
    %58 = arith.truncf %57 : vector<128x128xf32> to vector<128x128xbf16>
    %c0_29 = arith.constant 0 : index
    %c0_30 = arith.constant 0 : index
    %59 = vector.load %arg5[%c0_29, %c0_30] : memref<128x128xbf16, #tpu.memory_space<vmem>>, vector<128x128xbf16>
    tpu.vector_store %arg5[%c0_29, %c0_30], %58 {strides = array<i32>} : memref<128x128xbf16, #tpu.memory_space<vmem>>, vector<128x128xbf16>,
    return
  }
  func.func @transform_0(%arg0: i32) -> (i32, i32) {
    %c0_i32 = arith.constant 0 : i32
    %c0_i32_0 = arith.constant 0 : i32
    return %arg0, %c0_i32 : i32, i32
  }
  func.func @transform_1(%arg0: i32) -> (i32, i32, i32) {
    %c0_i32 = arith.constant 0 : i32
    %c0_i32_0 = arith.constant 0 : i32
    %c0_i32_1 = arith.constant 0 : i32
    %c0_i32_2 = arith.constant 0 : i32
    return %c0_i32, %c0_i32_0, %c0_i32_1 : i32, i32, i32
  }
  func.func @transform_2(%arg0: i32) -> (i32, i32, i32) {
    %c0_i32 = arith.constant 0 : i32
    %c0_i32_0 = arith.constant 0 : i32
    %c0_i32_1 = arith.constant 0 : i32
    %c0_i32_2 = arith.constant 0 : i32
    return %c0_i32, %c0_i32_0, %c0_i32_1 : i32, i32, i32
  }
  func.func @transform_3(%arg0: i32) -> (i32, i32) {
    %c0_i32 = arith.constant 0 : i32
    %c0_i32_0 = arith.constant 0 : i32
    %c0_i32_1 = arith.constant 0 : i32
    return %c0_i32, %c0_i32_0 : i32, i32
  }
  func.func @transform_4(%arg0: i32) -> (i32, i32) {
    %c0_i32 = arith.constant 0 : i32
    %c0_i32_0 = arith.constant 0 : i32
    return %arg0, %c0_i32 : i32, i32
  }
}

</mosaic_0001>

<llo_original>
// kernel: tpu_custom_call.1
$region0: #{tpu_custom_call.1}
  #allocation0 [shape = 'u32[]', space=smem, size = 0x4, offset = 0x4, fixed_abs, tag = 'smem constant byte address 0x4 - core index']
  #allocation1 [shape = 'u32[72,128]{1,0:T(1,128)}', space=vmem, size = 0x9000, scoped, tag = 'internal scratch']
  %s0 = inlined_call_operand.hbm [shape: bf16[128,128], index: 0, kind: input, shape index: {}, may-alias: {0,4}]
  %s1 = inlined_call_operand.hbm [shape: bf16[3,128,128], index: 1, kind: input, shape index: {}]
  %s2 = inlined_call_operand.vmem [shape: f32[3,1,128], index: 2, kind: input, shape index: {}]
  %s3 = inlined_call_operand.vmem [shape: f32[2,128], index: 3, kind: input, shape index: {}]
  %s4 = inlined_call_operand.hbm [shape: bf16[128,128], index: 4, kind: output, shape index: {}, may-alias: {0,4}]
  %s5 = sld [smem:[#allocation0]]
  $region34: #{tpu_custom_call.1} parent=0
    _
  %s7 = ssub.s32 1, %s5
  %s8 = scalar_select 0, %s7, %s5
  $region1: #{tpu_custom_call.1} parent=0
    #allocation2 [shape = 'u8[32768]{0}', space=vmem, size = 0x8000, scoped, tag = 'input window, operand 0, single buffered']
    #allocation3 [shape = 's32[1]{0}', space=sflag, size = 0x4, scoped, tag = 'scoped memory for tpu_custom_call.1']
    #allocation4 [shape = 's32[1]{0}', space=sflag, size = 0x4, scoped, tag = 'scoped memory for tpu_custom_call.1']
    #allocation5 [shape = 'u8[98304]{0}', space=vmem, size = 0x18000, scoped, tag = 'input window, operand 1, single buffered']
    #allocation6 [shape = 's32[1]{0}', space=sflag, size = 0x4, scoped, tag = 'scoped memory for tpu_custom_call.1']
    #allocation7 [shape = 'u8[32768]{0}', space=vmem, size = 0x8000, scoped, tag = 'output window, operand 0, single buffered']
    %9 = vsyncpa [#allocation3], 0
    %10 = vsyncpa [#allocation6], 0
    %11 = vsyncpa [#allocation4], 0
    // Predicated region
    $region2: #{tpu_custom_call.1} parent=1 // pred_check
      _
    $region3: #{tpu_custom_call.1} parent=1 // pred_check_branch
      %13 = sbr.rel (0) target = $region5
    $region4: #{tpu_custom_call.1} parent=1 // pred_region
      %15 = vsyncadd [#allocation3], 0
      %s16 = sshll.u32 %s0, 4
      %s17 = int_to_ptr.hbm [resolvable:$true] %s16
      %s18 = sshll.u32 [#allocation2], 4
      %s19 = int_to_ptr.vmem [resolvable:$true] %s18
      %24 = dma.hbm_to_vmem [thread:$0]  %s17, 1024, %s19, [#allocation3], 64, 64, 4
    $region5: #{tpu_custom_call.1} parent=1 // pred_fallthru
      _
    // Predicated region
    $region6: #{tpu_custom_call.1} parent=1 // pred_check
      _
    $region7: #{tpu_custom_call.1} parent=1 // pred_check_branch
      %26 = sbr.rel (0) target = $region9
    $region8: #{tpu_custom_call.1} parent=1 // pred_region
      %28 = vsyncadd [#allocation6], 0
      %s29 = sshll.u32 %s1, 4
      %s30 = int_to_ptr.hbm [resolvable:$true] %s29
      %s31 = sshll.u32 [#allocation5], 4
      %s32 = int_to_ptr.vmem [resolvable:$true] %s31
      %37 = dma.hbm_to_vmem [thread:$0]  %s30, 3072, %s32, [#allocation6], 64, 64, 4
    $region9: #{tpu_custom_call.1} parent=1 // pred_fallthru
      _
    // Predicated region
    $region10: #{tpu_custom_call.1} parent=1 // pred_check
      _
    $region11: #{tpu_custom_call.1} parent=1 // pred_check_branch
      %39 = sbr.rel (0) target = $region13
    $region12: #{tpu_custom_call.1} parent=1 // pred_region
      _
    $region13: #{tpu_custom_call.1} parent=1 // pred_fallthru
      _
    // Predicated region
    $region14: #{tpu_custom_call.1} parent=1 // pred_check
      _
    $region15: #{tpu_custom_call.1} parent=1 // pred_check_branch
      %41 = sbr.rel (0) target = $region17
    $region16: #{tpu_custom_call.1} parent=1 // pred_region
      _
    $region17: #{tpu_custom_call.1} parent=1 // pred_fallthru
      _
    // Predicated region
    $region18: #{tpu_custom_call.1} parent=1 // pred_check
      _
    $region19: #{tpu_custom_call.1} parent=1 // pred_check_branch
      %43 = sbr.rel (0) target = $region21
    $region20: #{tpu_custom_call.1} parent=1 // pred_region
      %45 = dma.done [#allocation3], 1024
    $region21: #{tpu_custom_call.1} parent=1 // pred_fallthru
      _
    // Predicated region
    $region22: #{tpu_custom_call.1} parent=1 // pred_check
      _
    $region23: #{tpu_custom_call.1} parent=1 // pred_check_branch
      %47 = sbr.rel (0) target = $region25
    $region24: #{tpu_custom_call.1} parent=1 // pred_region
      %49 = dma.done [#allocation6], 3072
    $region25: #{tpu_custom_call.1} parent=1 // pred_fallthru
      _
    %v50 = vld [vmem:[#allocation2] sm:$0xf]
    %v51 = vld [vmem:[#allocation2 + $0x4] sm:$0xf]
    %v52 = vld [vmem:[#allocation2 + $0x8] sm:$0xf]
    %v53 = vld [vmem:[#allocation2 + $0xc] sm:$0xf]
    %v54 = vld [vmem:[#allocation2 + $0x10] sm:$0xf]
    %v55 = vld [vmem:[#allocation2 + $0x14] sm:$0xf]
    %v56 = vld [vmem:[#allocation2 + $0x18] sm:$0xf]
    %v57 = vld [vmem:[#allocation2 + $0x1c] sm:$0xf]
    %v58 = vld [vmem:[#allocation2 + $0x20] sm:$0xf]
    %v59 = vld [vmem:[#allocation2 + $0x24] sm:$0xf]
    %v60 = vld [vmem:[#allocation2 + $0x28] sm:$0xf]
    %v61 = vld [vmem:[#allocation2 + $0x2c] sm:$0xf]
    %v62 = vld [vmem:[#allocation2 + $0x30] sm:$0xf]
    %v63 = vld [vmem:[#allocation2 + $0x34] sm:$0xf]
    %v64 = vld [vmem:[#allocation2 + $0x38] sm:$0xf]
    %v65 = vld [vmem:[#allocation2 + $0x3c] sm:$0xf]
    %v66 = vunpack.c.l.bf16 %v50
    %v67 = vunpack.c.l.bf16 %v51
    %v68 = vunpack.c.l.bf16 %v52
    %v69 = vunpack.c.l.bf16 %v53
    %v70 = vunpack.c.l.bf16 %v54
    %v71 = vunpack.c.l.bf16 %v55
    %v72 = vunpack.c.l.bf16 %v56
    %v73 = vunpack.c.l.bf16 %v57
    %v74 = vunpack.c.l.bf16 %v58
    %v75 = vunpack.c.l.bf16 %v59
    %v76 = vunpack.c.l.bf16 %v60
    %v77 = vunpack.c.l.bf16 %v61
    %v78 = vunpack.c.l.bf16 %v62
    %v79 = vunpack.c.l.bf16 %v63
    %v80 = vunpack.c.l.bf16 %v64
    %v81 = vunpack.c.l.bf16 %v65
    %v82 = vld [vmem:[%s3] sm:$0x3]
    %v83 = vld [vmem:[#allocation5] sm:$0xf]
    %v84 = vld [vmem:[#allocation5 + $0x4] sm:$0xf]
    %v85 = vld [vmem:[#allocation5 + $0x8] sm:$0xf]
    %v86 = vld [vmem:[#allocation5 + $0xc] sm:$0xf]
    %v87 = vld [vmem:[#allocation5 + $0x10] sm:$0xf]
    %v88 = vld [vmem:[#allocation5 + $0x14] sm:$0xf]
    %v89 = vld [vmem:[#allocation5 + $0x18] sm:$0xf]
    %v90 = vld [vmem:[#allocation5 + $0x1c] sm:$0xf]
    %v91 = vld [vmem:[#allocation5 + $0x20] sm:$0xf]
    %v92 = vld [vmem:[#allocation5 + $0x24] sm:$0xf]
    %v93 = vld [vmem:[#allocation5 + $0x28] sm:$0xf]
    %v94 = vld [vmem:[#allocation5 + $0x2c] sm:$0xf]
    %v95 = vld [vmem:[#allocation5 + $0x30] sm:$0xf]
    %v96 = vld [vmem:[#allocation5 + $0x34] sm:$0xf]
    %v97 = vld [vmem:[#allocation5 + $0x38] sm:$0xf]
    %v98 = vld [vmem:[#allocation5 + $0x3c] sm:$0xf]
    %v99 = vld [vmem:[%s2] sm:$0x1]
    %v101 = vperm.slane %v99, 0
    %v119 = vunpack.c.l.b16 %v50
    %v120 = vunpack.c.l.b16 %v51
    %v121 = vunpack.c.l.b16 %v52
    %v122 = vunpack.c.l.b16 %v53
    %v123 = vunpack.c.l.b16 %v54
    %v124 = vunpack.c.l.b16 %v55
    %v125 = vunpack.c.l.b16 %v56
    %v126 = vunpack.c.l.b16 %v57
    %v127 = vunpack.c.l.b16 %v58
    %v128 = vunpack.c.l.b16 %v59
    %v129 = vunpack.c.l.b16 %v60
    %v130 = vunpack.c.l.b16 %v61
    %v131 = vunpack.c.l.b16 %v62
    %v132 = vunpack.c.l.b16 %v63
    %v133 = vunpack.c.l.b16 %v64
    %v134 = vunpack.c.l.b16 %v65
    %v135 = vpack.c.b16 %v120, %v119
    %v136 = vpack.c.b16 %v122, %v121
    %v137 = vpack.c.b16 %v124, %v123
    %v138 = vpack.c.b16 %v126, %v125
    %v139 = vpack.c.b16 %v128, %v127
    %v140 = vpack.c.b16 %v130, %v129
    %v141 = vpack.c.b16 %v132, %v131
    %v142 = vpack.c.b16 %v134, %v133
    %v167 = vunpack.c.l.b16 %v83
    %v168 = vunpack.c.l.b16 %v84
    %v169 = vunpack.c.l.b16 %v85
    %v170 = vunpack.c.l.b16 %v86
    %v171 = vunpack.c.l.b16 %v87
    %v172 = vunpack.c.l.b16 %v88
    %v173 = vunpack.c.l.b16 %v89
    %v174 = vunpack.c.l.b16 %v90
    %v175 = vunpack.c.l.b16 %v91
    %v176 = vunpack.c.l.b16 %v92
    %v177 = vunpack.c.l.b16 %v93
    %v178 = vunpack.c.l.b16 %v94
    %v179 = vunpack.c.l.b16 %v95
    %v180 = vunpack.c.l.b16 %v96
    %v181 = vunpack.c.l.b16 %v97
    %v182 = vunpack.c.l.b16 %v98
    %v183 = vpack.c.b16 %v168, %v167
    %v184 = vpack.c.b16 %v170, %v169
    %v185 = vpack.c.b16 %v172, %v171
    %v186 = vpack.c.b16 %v174, %v173
    %v187 = vpack.c.b16 %v176, %v175
    %v188 = vpack.c.b16 %v178, %v177
    %v189 = vpack.c.b16 %v180, %v179
    %v190 = vpack.c.b16 %v182, %v181
    %199 = vmatpush.bf16.msra.mxu0 %v190
    %200 = vmatpush.bf16.msra.mxu0 %v189
    %201 = vmatpush.bf16.msra.mxu0 %v188
    %202 = vmatpush.bf16.msra.mxu0 %v187
    %203 = vmatpush.bf16.msra.mxu0 %v186
    %204 = vmatpush.bf16.msra.mxu0 %v185
    %205 = vmatpush.bf16.msra.mxu0 %v184
    %206 = vmatpush.bf16.msra.mxu0 %v183
    %207 = vmatmul.bf16.gmra.mxu0 %v135
    %v208 = vpop.f32.mrf.mxu0
    %v209 = vadd.f32 %v101, %v208
    %v210 = vpop.f32.mrf.mxu0
    %v211 = vadd.f32 %v101, %v210
    %212 = vmatmul.bf16.gmra.mxu0 %v136
    %v213 = vpop.f32.mrf.mxu0
    %v214 = vadd.f32 %v101, %v213
    %v215 = vpop.f32.mrf.mxu0
    %v216 = vadd.f32 %v101, %v215
    %217 = vmatmul.bf16.gmra.mxu0 %v137
    %v218 = vpop.f32.mrf.mxu0
    %v219 = vadd.f32 %v101, %v218
    %v220 = vpop.f32.mrf.mxu0
    %v221 = vadd.f32 %v101, %v220
    %222 = vmatmul.bf16.gmra.mxu0 %v138
    %v223 = vpop.f32.mrf.mxu0
    %v224 = vadd.f32 %v101, %v223
    %v225 = vpop.f32.mrf.mxu0
    %v226 = vadd.f32 %v101, %v225
    %227 = vmatmul.bf16.gmra.mxu0 %v139
    %v228 = vpop.f32.mrf.mxu0
    %v229 = vadd.f32 %v101, %v228
    %v230 = vpop.f32.mrf.mxu0
    %v231 = vadd.f32 %v101, %v230
    %232 = vmatmul.bf16.gmra.mxu0 %v140
    %v233 = vpop.f32.mrf.mxu0
    %v234 = vadd.f32 %v101, %v233
    %v235 = vpop.f32.mrf.mxu0
    %v236 = vadd.f32 %v101, %v235
    %237 = vmatmul.bf16.gmra.mxu0 %v141
    %v238 = vpop.f32.mrf.mxu0
    %v239 = vadd.f32 %v101, %v238
    %v240 = vpop.f32.mrf.mxu0
    %v241 = vadd.f32 %v101, %v240
    %242 = vmatmul.bf16.gmra.mxu0 %v142
    %v243 = vpop.f32.mrf.mxu0
    %v244 = vadd.f32 %v101, %v243
    %v245 = vpop.f32.mrf.mxu0
    %v246 = vadd.f32 %v101, %v245
    %247 = vdwg.mxu0
    %v248 = vmax.f32 %v209, 0.0
    %v249 = vmax.f32 %v211, 0.0
    %v250 = vmax.f32 %v214, 0.0
    %v251 = vmax.f32 %v216, 0.0
    %v252 = vmax.f32 %v219, 0.0
    %v253 = vmax.f32 %v221, 0.0
    %v254 = vmax.f32 %v224, 0.0
    %v255 = vmax.f32 %v226, 0.0
    %v256 = vmax.f32 %v229, 0.0
    %v257 = vmax.f32 %v231, 0.0
    %v258 = vmax.f32 %v234, 0.0
    %v259 = vmax.f32 %v236, 0.0
    %v260 = vmax.f32 %v239, 0.0
    %v261 = vmax.f32 %v241, 0.0
    %v262 = vmax.f32 %v244, 0.0
    %v263 = vmax.f32 %v246, 0.0
    %v264 = vadd.f32 %v66, %v248
    %v265 = vadd.f32 %v67, %v249
    %v266 = vadd.f32 %v68, %v250
    %v267 = vadd.f32 %v69, %v251
    %v268 = vadd.f32 %v70, %v252
    %v269 = vadd.f32 %v71, %v253
    %v270 = vadd.f32 %v72, %v254
    %v271 = vadd.f32 %v73, %v255
    %v272 = vadd.f32 %v74, %v256
    %v273 = vadd.f32 %v75, %v257
    %v274 = vadd.f32 %v76, %v258
    %v275 = vadd.f32 %v77, %v259
    %v276 = vadd.f32 %v78, %v260
    %v277 = vadd.f32 %v79, %v261
    %v278 = vadd.f32 %v80, %v262
    %v279 = vadd.f32 %v81, %v263
    %s280 = scalar_lea.vmem [#allocation5], 64
    %v281 = vld [vmem:[%s280] sm:$0xf]
    %v282 = vld [vmem:[%s280 + $0x4] sm:$0xf]
    %v283 = vld [vmem:[%s280 + $0x8] sm:$0xf]
    %v284 = vld [vmem:[%s280 + $0xc] sm:$0xf]
    %v285 = vld [vmem:[%s280 + $0x10] sm:$0xf]
    %v286 = vld [vmem:[%s280 + $0x14] sm:$0xf]
    %v287 = vld [vmem:[%s280 + $0x18] sm:$0xf]
    %v288 = vld [vmem:[%s280 + $0x1c] sm:$0xf]
    %v289 = vld [vmem:[%s280 + $0x20] sm:$0xf]
    %v290 = vld [vmem:[%s280 + $0x24] sm:$0xf]
    %v291 = vld [vmem:[%s280 + $0x28] sm:$0xf]
    %v292 = vld [vmem:[%s280 + $0x2c] sm:$0xf]
    %v293 = vld [vmem:[%s280 + $0x30] sm:$0xf]
    %v294 = vld [vmem:[%s280 + $0x34] sm:$0xf]
    %v295 = vld [vmem:[%s280 + $0x38] sm:$0xf]
    %v296 = vld [vmem:[%s280 + $0x3c] sm:$0xf]
    %s297 = scalar_lea.vmem %s2, 1
    %v298 = vld [vmem:[%s297] sm:$0x1]
    %v299 = vpack.c.bf16 %v265, %v264
    %v300 = vpack.c.bf16 %v267, %v266
    %v301 = vpack.c.bf16 %v269, %v268
    %v302 = vpack.c.bf16 %v271, %v270
    %v303 = vpack.c.bf16 %v273, %v272
    %v304 = vpack.c.bf16 %v275, %v274
    %v305 = vpack.c.bf16 %v277, %v276
    %v306 = vpack.c.bf16 %v279, %v278
    %v308 = vperm.slane %v298, 0
    %v326 = vunpack.c.l.b16 %v281
    %v327 = vunpack.c.l.b16 %v282
    %v328 = vunpack.c.l.b16 %v283
    %v329 = vunpack.c.l.b16 %v284
    %v330 = vunpack.c.l.b16 %v285
    %v331 = vunpack.c.l.b16 %v286
    %v332 = vunpack.c.l.b16 %v287
    %v333 = vunpack.c.l.b16 %v288
    %v334 = vunpack.c.l.b16 %v289
    %v335 = vunpack.c.l.b16 %v290
    %v336 = vunpack.c.l.b16 %v291
    %v337 = vunpack.c.l.b16 %v292
    %v338 = vunpack.c.l.b16 %v293
    %v339 = vunpack.c.l.b16 %v294
    %v340 = vunpack.c.l.b16 %v295
    %v341 = vunpack.c.l.b16 %v296
    %v342 = vpack.c.b16 %v327, %v326
    %v343 = vpack.c.b16 %v329, %v328
    %v344 = vpack.c.b16 %v331, %v330
    %v345 = vpack.c.b16 %v333, %v332
    %v346 = vpack.c.b16 %v335, %v334
    %v347 = vpack.c.b16 %v337, %v336
    %v348 = vpack.c.b16 %v339, %v338
    %v349 = vpack.c.b16 %v341, %v340
    %358 = vmatpush.bf16.msra.mxu0 %v349
    %359 = vmatpush.bf16.msra.mxu0 %v348
    %360 = vmatpush.bf16.msra.mxu0 %v347
    %361 = vmatpush.bf16.msra.mxu0 %v346
    %362 = vmatpush.bf16.msra.mxu0 %v345
    %363 = vmatpush.bf16.msra.mxu0 %v344
    %364 = vmatpush.bf16.msra.mxu0 %v343
    %365 = vmatpush.bf16.msra.mxu0 %v342
    %366 = vmatmul.bf16.gmra.mxu0 %v299
    %v367 = vpop.f32.mrf.mxu0
    %v368 = vadd.f32 %v308, %v367
    %v369 = vpop.f32.mrf.mxu0
    %v370 = vadd.f32 %v308, %v369
    %371 = vmatmul.bf16.gmra.mxu0 %v300
    %v372 = vpop.f32.mrf.mxu0
    %v373 = vadd.f32 %v308, %v372
    %v374 = vpop.f32.mrf.mxu0
    %v375 = vadd.f32 %v308, %v374
    %376 = vmatmul.bf16.gmra.mxu0 %v301
    %v377 = vpop.f32.mrf.mxu0
    %v378 = vadd.f32 %v308, %v377
    %v379 = vpop.f32.mrf.mxu0
    %v380 = vadd.f32 %v308, %v379
    %381 = vmatmul.bf16.gmra.mxu0 %v302
    %v382 = vpop.f32.mrf.mxu0
    %v383 = vadd.f32 %v308, %v382
    %v384 = vpop.f32.mrf.mxu0
    %v385 = vadd.f32 %v308, %v384
    %386 = vmatmul.bf16.gmra.mxu0 %v303
    %v387 = vpop.f32.mrf.mxu0
    %v388 = vadd.f32 %v308, %v387
    %v389 = vpop.f32.mrf.mxu0
    %v390 = vadd.f32 %v308, %v389
    %391 = vmatmul.bf16.gmra.mxu0 %v304
    %v392 = vpop.f32.mrf.mxu0
    %v393 = vadd.f32 %v308, %v392
    %v394 = vpop.f32.mrf.mxu0
    %v395 = vadd.f32 %v308, %v394
    %396 = vmatmul.bf16.gmra.mxu0 %v305
    %v397 = vpop.f32.mrf.mxu0
    %v398 = vadd.f32 %v308, %v397
    %v399 = vpop.f32.mrf.mxu0
    %v400 = vadd.f32 %v308, %v399
    %401 = vmatmul.bf16.gmra.mxu0 %v306
    %v402 = vpop.f32.mrf.mxu0
    %v403 = vadd.f32 %v308, %v402
    %v404 = vpop.f32.mrf.mxu0
    %v405 = vadd.f32 %v308, %v404
    %406 = vdwg.mxu0
    %v407 = vmax.f32 %v368, 0.0
    %v408 = vmax.f32 %v370, 0.0
    %v409 = vmax.f32 %v373, 0.0
    %v410 = vmax.f32 %v375, 0.0
    %v411 = vmax.f32 %v378, 0.0
    %v412 = vmax.f32 %v380, 0.0
    %v413 = vmax.f32 %v383, 0.0
    %v414 = vmax.f32 %v385, 0.0
    %v415 = vmax.f32 %v388, 0.0
    %v416 = vmax.f32 %v390, 0.0
    %v417 = vmax.f32 %v393, 0.0
    %v418 = vmax.f32 %v395, 0.0
    %v419 = vmax.f32 %v398, 0.0
    %v420 = vmax.f32 %v400, 0.0
    %v421 = vmax.f32 %v403, 0.0
    %v422 = vmax.f32 %v405, 0.0
    %v423 = vadd.f32 %v264, %v407
    %v424 = vadd.f32 %v265, %v408
    %v425 = vadd.f32 %v266, %v409
    %v426 = vadd.f32 %v267, %v410
    %v427 = vadd.f32 %v268, %v411
    %v428 = vadd.f32 %v269, %v412
    %v429 = vadd.f32 %v270, %v413
    %v430 = vadd.f32 %v271, %v414
    %v431 = vadd.f32 %v272, %v415
    %v432 = vadd.f32 %v273, %v416
    %v433 = vadd.f32 %v274, %v417
    %v434 = vadd.f32 %v275, %v418
    %v435 = vadd.f32 %v276, %v419
    %v436 = vadd.f32 %v277, %v420
    %v437 = vadd.f32 %v278, %v421
    %v438 = vadd.f32 %v279, %v422
    %s439 = scalar_lea.vmem [#allocation5], 128
    %v440 = vld [vmem:[%s439] sm:$0xf]
    %v441 = vld [vmem:[%s439 + $0x4] sm:$0xf]
    %v442 = vld [vmem:[%s439 + $0x8] sm:$0xf]
    %v443 = vld [vmem:[%s439 + $0xc] sm:$0xf]
    %v444 = vld [vmem:[%s439 + $0x10] sm:$0xf]
    %v445 = vld [vmem:[%s439 + $0x14] sm:$0xf]
    %v446 = vld [vmem:[%s439 + $0x18] sm:$0xf]
    %v447 = vld [vmem:[%s439 + $0x1c] sm:$0xf]
    %v448 = vld [vmem:[%s439 + $0x20] sm:$0xf]
    %v449 = vld [vmem:[%s439 + $0x24] sm:$0xf]
    %v450 = vld [vmem:[%s439 + $0x28] sm:$0xf]
    %v451 = vld [vmem:[%s439 + $0x2c] sm:$0xf]
    %v452 = vld [vmem:[%s439 + $0x30] sm:$0xf]
    %v453 = vld [vmem:[%s439 + $0x34] sm:$0xf]
    %v454 = vld [vmem:[%s439 + $0x38] sm:$0xf]
    %v455 = vld [vmem:[%s439 + $0x3c] sm:$0xf]
    %s456 = scalar_lea.vmem %s2, 2
    %v457 = vld [vmem:[%s456] sm:$0x1]
    %v458 = vpack.c.bf16 %v424, %v423
    %v459 = vpack.c.bf16 %v426, %v425
    %v460 = vpack.c.bf16 %v428, %v427
    %v461 = vpack.c.bf16 %v430, %v429
    %v462 = vpack.c.bf16 %v432, %v431
    %v463 = vpack.c.bf16 %v434, %v433
    %v464 = vpack.c.bf16 %v436, %v435
    %v465 = vpack.c.bf16 %v438, %v437
    %v467 = vperm.slane %v457, 0
    %v485 = vunpack.c.l.b16 %v440
    %v486 = vunpack.c.l.b16 %v441
    %v487 = vunpack.c.l.b16 %v442
    %v488 = vunpack.c.l.b16 %v443
    %v489 = vunpack.c.l.b16 %v444
    %v490 = vunpack.c.l.b16 %v445
    %v491 = vunpack.c.l.b16 %v446
    %v492 = vunpack.c.l.b16 %v447
    %v493 = vunpack.c.l.b16 %v448
    %v494 = vunpack.c.l.b16 %v449
    %v495 = vunpack.c.l.b16 %v450
    %v496 = vunpack.c.l.b16 %v451
    %v497 = vunpack.c.l.b16 %v452
    %v498 = vunpack.c.l.b16 %v453
    %v499 = vunpack.c.l.b16 %v454
    %v500 = vunpack.c.l.b16 %v455
    %v501 = vpack.c.b16 %v486, %v485
    %v502 = vpack.c.b16 %v488, %v487
    %v503 = vpack.c.b16 %v490, %v489
    %v504 = vpack.c.b16 %v492, %v491
    %v505 = vpack.c.b16 %v494, %v493
    %v506 = vpack.c.b16 %v496, %v495
    %v507 = vpack.c.b16 %v498, %v497
    %v508 = vpack.c.b16 %v500, %v499
    %517 = vmatpush.bf16.msra.mxu0 %v508
    %518 = vmatpush.bf16.msra.mxu0 %v507
    %519 = vmatpush.bf16.msra.mxu0 %v506
    %520 = vmatpush.bf16.msra.mxu0 %v505
    %521 = vmatpush.bf16.msra.mxu0 %v504
    %522 = vmatpush.bf16.msra.mxu0 %v503
    %523 = vmatpush.bf16.msra.mxu0 %v502
    %524 = vmatpush.bf16.msra.mxu0 %v501
    %525 = vmatmul.bf16.gmra.mxu0 %v458
    %v526 = vpop.f32.mrf.mxu0
    %v527 = vadd.f32 %v467, %v526
    %v528 = vpop.f32.mrf.mxu0
    %v529 = vadd.f32 %v467, %v528
    %530 = vmatmul.bf16.gmra.mxu0 %v459
    %v531 = vpop.f32.mrf.mxu0
    %v532 = vadd.f32 %v467, %v531
    %v533 = vpop.f32.mrf.mxu0
    %v534 = vadd.f32 %v467, %v533
    %535 = vmatmul.bf16.gmra.mxu0 %v460
    %v536 = vpop.f32.mrf.mxu0
    %v537 = vadd.f32 %v467, %v536
    %v538 = vpop.f32.mrf.mxu0
    %v539 = vadd.f32 %v467, %v538
    %540 = vmatmul.bf16.gmra.mxu0 %v461
    %v541 = vpop.f32.mrf.mxu0
    %v542 = vadd.f32 %v467, %v541
    %v543 = vpop.f32.mrf.mxu0
    %v544 = vadd.f32 %v467, %v543
    %545 = vmatmul.bf16.gmra.mxu0 %v462
    %v546 = vpop.f32.mrf.mxu0
    %v547 = vadd.f32 %v467, %v546
    %v548 = vpop.f32.mrf.mxu0
    %v549 = vadd.f32 %v467, %v548
    %550 = vmatmul.bf16.gmra.mxu0 %v463
    %v551 = vpop.f32.mrf.mxu0
    %v552 = vadd.f32 %v467, %v551
    %v553 = vpop.f32.mrf.mxu0
    %v554 = vadd.f32 %v467, %v553
    %555 = vmatmul.bf16.gmra.mxu0 %v464
    %v556 = vpop.f32.mrf.mxu0
    %v557 = vadd.f32 %v467, %v556
    %v558 = vpop.f32.mrf.mxu0
    %v559 = vadd.f32 %v467, %v558
    %560 = vmatmul.bf16.gmra.mxu0 %v465
    %v561 = vpop.f32.mrf.mxu0
    %v562 = vadd.f32 %v467, %v561
    %v563 = vpop.f32.mrf.mxu0
    %v564 = vadd.f32 %v467, %v563
    %565 = vdwg.mxu0
    %v566 = vmax.f32 %v527, 0.0
    %v567 = vmax.f32 %v529, 0.0
    %v568 = vmax.f32 %v532, 0.0
    %v569 = vmax.f32 %v534, 0.0
    %v570 = vmax.f32 %v537, 0.0
    %v571 = vmax.f32 %v539, 0.0
    %v572 = vmax.f32 %v542, 0.0
    %v573 = vmax.f32 %v544, 0.0
    %v574 = vmax.f32 %v547, 0.0
    %v575 = vmax.f32 %v549, 0.0
    %v576 = vmax.f32 %v552, 0.0
    %v577 = vmax.f32 %v554, 0.0
    %v578 = vmax.f32 %v557, 0.0
    %v579 = vmax.f32 %v559, 0.0
    %v580 = vmax.f32 %v562, 0.0
    %v581 = vmax.f32 %v564, 0.0
    %v582 = vadd.f32 %v423, %v566
    %v583 = vadd.f32 %v424, %v567
    %v584 = vadd.f32 %v425, %v568
    %v585 = vadd.f32 %v426, %v569
    %v586 = vadd.f32 %v427, %v570
    %v587 = vadd.f32 %v428, %v571
    %v588 = vadd.f32 %v429, %v572
    %v589 = vadd.f32 %v430, %v573
    %v590 = vadd.f32 %v431, %v574
    %v591 = vadd.f32 %v432, %v575
    %v592 = vadd.f32 %v433, %v576
    %v593 = vadd.f32 %v434, %v577
    %v594 = vadd.f32 %v435, %v578
    %v595 = vadd.f32 %v436, %v579
    %v596 = vadd.f32 %v437, %v580
    %v597 = vadd.f32 %v438, %v581
    %598 = vadd.xlane.f32.xlu0 %v582
    %v599 = vpop.xlane.xlu0 %598
    %600 = vadd.xlane.f32.xlu0 %v583
    %v601 = vpop.xlane.xlu0 %600
    %602 = vadd.xlane.f32.xlu0 %v584
    %v603 = vpop.xlane.xlu0 %602
    %604 = vadd.xlane.f32.xlu0 %v585
    %v605 = vpop.xlane.xlu0 %604
    %606 = vadd.xlane.f32.xlu0 %v586
    %v607 = vpop.xlane.xlu0 %606
    %608 = vadd.xlane.f32.xlu0 %v587
    %v609 = vpop.xlane.xlu0 %608
    %610 = vadd.xlane.f32.xlu0 %v588
    %v611 = vpop.xlane.xlu0 %610
    %612 = vadd.xlane.f32.xlu0 %v589
    %v613 = vpop.xlane.xlu0 %612
    %614 = vadd.xlane.f32.xlu0 %v590
    %v615 = vpop.xlane.xlu0 %614
    %616 = vadd.xlane.f32.xlu0 %v591
    %v617 = vpop.xlane.xlu0 %616
    %618 = vadd.xlane.f32.xlu0 %v592
    %v619 = vpop.xlane.xlu0 %618
    %620 = vadd.xlane.f32.xlu0 %v593
    %v621 = vpop.xlane.xlu0 %620
    %622 = vadd.xlane.f32.xlu0 %v594
    %v623 = vpop.xlane.xlu0 %622
    %624 = vadd.xlane.f32.xlu0 %v595
    %v625 = vpop.xlane.xlu0 %624
    %626 = vadd.xlane.f32.xlu0 %v596
    %v627 = vpop.xlane.xlu0 %626
    %628 = vadd.xlane.f32.xlu0 %v597
    %v629 = vpop.xlane.xlu0 %628
    %v630 = vrcp.pop 128.0
    %v631 = vmul.f32 128.0, %v630
    %v632 = vsub.f32 1.0, %v631
    %v633 = vmul.f32 %v630, %v632
    %v634 = vadd.f32 %v630, %v633
    %vm635 = vweird.f32 %v630
    %v636 = vsel %vm635, %v630, %v634
    %v637 = vmul.f32 %v599, %v636
    %v638 = vmul.f32 %v601, %v636
    %v639 = vmul.f32 %v603, %v636
    %v640 = vmul.f32 %v605, %v636
    %v641 = vmul.f32 %v607, %v636
    %v642 = vmul.f32 %v609, %v636
    %v643 = vmul.f32 %v611, %v636
    %v644 = vmul.f32 %v613, %v636
    %v645 = vmul.f32 %v615, %v636
    %v646 = vmul.f32 %v617, %v636
    %v647 = vmul.f32 %v619, %v636
    %v648 = vmul.f32 %v621, %v636
    %v649 = vmul.f32 %v623, %v636
    %v650 = vmul.f32 %v625, %v636
    %v651 = vmul.f32 %v627, %v636
    %v652 = vmul.f32 %v629, %v636
    %v653 = vsub.f32 %v582, %v637
    %v654 = vsub.f32 %v583, %v638
    %v655 = vsub.f32 %v584, %v639
    %v656 = vsub.f32 %v585, %v640
    %v657 = vsub.f32 %v586, %v641
    %v658 = vsub.f32 %v587, %v642
    %v659 = vsub.f32 %v588, %v643
    %v660 = vsub.f32 %v589, %v644
    %v661 = vsub.f32 %v590, %v645
    %v662 = vsub.f32 %v591, %v646
    %v663 = vsub.f32 %v592, %v647
    %v664 = vsub.f32 %v593, %v648
    %v665 = vsub.f32 %v594, %v649
    %v666 = vsub.f32 %v595, %v650
    %v667 = vsub.f32 %v596, %v651
    %v668 = vsub.f32 %v597, %v652
    %v669 = vmul.f32 %v653, %v653
    %v670 = vmul.f32 %v654, %v654
    %v671 = vmul.f32 %v655, %v655
    %v672 = vmul.f32 %v656, %v656
    %v673 = vmul.f32 %v657, %v657
    %v674 = vmul.f32 %v658, %v658
    %v675 = vmul.f32 %v659, %v659
    %v676 = vmul.f32 %v660, %v660
    %v677 = vmul.f32 %v661, %v661
    %v678 = vmul.f32 %v662, %v662
    %v679 = vmul.f32 %v663, %v663
    %v680 = vmul.f32 %v664, %v664
    %v681 = vmul.f32 %v665, %v665
    %v682 = vmul.f32 %v666, %v666
    %v683 = vmul.f32 %v667, %v667
    %v684 = vmul.f32 %v668, %v668
    %685 = vadd.xlane.f32.xlu0 %v669
    %v686 = vpop.xlane.xlu0 %685
    %687 = vadd.xlane.f32.xlu0 %v670
    %v688 = vpop.xlane.xlu0 %687
    %689 = vadd.xlane.f32.xlu0 %v671
    %v690 = vpop.xlane.xlu0 %689
    %691 = vadd.xlane.f32.xlu0 %v672
    %v692 = vpop.xlane.xlu0 %691
    %693 = vadd.xlane.f32.xlu0 %v673
    %v694 = vpop.xlane.xlu0 %693
    %695 = vadd.xlane.f32.xlu0 %v674
    %v696 = vpop.xlane.xlu0 %695
    %697 = vadd.xlane.f32.xlu0 %v675
    %v698 = vpop.xlane.xlu0 %697
    %699 = vadd.xlane.f32.xlu0 %v676
    %v700 = vpop.xlane.xlu0 %699
    %701 = vadd.xlane.f32.xlu0 %v677
    %v702 = vpop.xlane.xlu0 %701
    %703 = vadd.xlane.f32.xlu0 %v678
    %v704 = vpop.xlane.xlu0 %703
    %705 = vadd.xlane.f32.xlu0 %v679
    %v706 = vpop.xlane.xlu0 %705
    %707 = vadd.xlane.f32.xlu0 %v680
    %v708 = vpop.xlane.xlu0 %707
    %709 = vadd.xlane.f32.xlu0 %v681
    %v710 = vpop.xlane.xlu0 %709
    %711 = vadd.xlane.f32.xlu0 %v682
    %v712 = vpop.xlane.xlu0 %711
    %713 = vadd.xlane.f32.xlu0 %v683
    %v714 = vpop.xlane.xlu0 %713
    %715 = vadd.xlane.f32.xlu0 %v684
    %v716 = vpop.xlane.xlu0 %715
    %v717 = vmul.f32 %v686, %v636
    %v718 = vmul.f32 %v688, %v636
    %v719 = vmul.f32 %v690, %v636
    %v720 = vmul.f32 %v692, %v636
    %v721 = vmul.f32 %v694, %v636
    %v722 = vmul.f32 %v696, %v636
    %v723 = vmul.f32 %v698, %v636
    %v724 = vmul.f32 %v700, %v636
    %v725 = vmul.f32 %v702, %v636
    %v726 = vmul.f32 %v704, %v636
    %v727 = vmul.f32 %v706, %v636
    %v728 = vmul.f32 %v708, %v636
    %v729 = vmul.f32 %v710, %v636
    %v730 = vmul.f32 %v712, %v636
    %v731 = vmul.f32 %v714, %v636
    %v732 = vmul.f32 %v716, %v636
    %v733 = vadd.f32 %v717, 1e-05
    %v734 = vadd.f32 %v718, 1e-05
    %v735 = vadd.f32 %v719, 1e-05
    %v736 = vadd.f32 %v720, 1e-05
    %v737 = vadd.f32 %v721, 1e-05
    %v738 = vadd.f32 %v722, 1e-05
    %v739 = vadd.f32 %v723, 1e-05
    %v740 = vadd.f32 %v724, 1e-05
    %v741 = vadd.f32 %v725, 1e-05
    %v742 = vadd.f32 %v726, 1e-05
    %v743 = vadd.f32 %v727, 1e-05
    %v744 = vadd.f32 %v728, 1e-05
    %v745 = vadd.f32 %v729, 1e-05
    %v746 = vadd.f32 %v730, 1e-05
    %v747 = vadd.f32 %v731, 1e-05
    %v748 = vadd.f32 %v732, 1e-05
    %v749 = vrsqrt.pop %v733
    %v750 = vmul.f32 %v749, %v733
    %v751 = vmul.f32 %v750, %v749
    %v752 = vmul.f32 0.5, %v751
    %v753 = vsub.f32 1.5, %v752
    %v754 = vmul.f32 %v749, %v753
    %vm755 = vweird.f32 %v733
    %vm756 = vweird.f32 %v749
    %vm757 = vmor %vm755, %vm756
    %v758 = vsel %vm757, %v749, %v754
    %v759 = vrsqrt.pop %v734
    %v760 = vmul.f32 %v759, %v734
    %v761 = vmul.f32 %v760, %v759
    %v762 = vmul.f32 0.5, %v761
    %v763 = vsub.f32 1.5, %v762
    %v764 = vmul.f32 %v759, %v763
    %vm765 = vweird.f32 %v734
    %vm766 = vweird.f32 %v759
    %vm767 = vmor %vm765, %vm766
    %v768 = vsel %vm767, %v759, %v764
    %v769 = vrsqrt.pop %v735
    %v770 = vmul.f32 %v769, %v735
    %v771 = vmul.f32 %v770, %v769
    %v772 = vmul.f32 0.5, %v771
    %v773 = vsub.f32 1.5, %v772
    %v774 = vmul.f32 %v769, %v773
    %vm775 = vweird.f32 %v735
    %vm776 = vweird.f32 %v769
    %vm777 = vmor %vm775, %vm776
    %v778 = vsel %vm777, %v769, %v774
    %v779 = vrsqrt.pop %v736
    %v780 = vmul.f32 %v779, %v736
    %v781 = vmul.f32 %v780, %v779
    %v782 = vmul.f32 0.5, %v781
    %v783 = vsub.f32 1.5, %v782
    %v784 = vmul.f32 %v779, %v783
    %vm785 = vweird.f32 %v736
    %vm786 = vweird.f32 %v779
    %vm787 = vmor %vm785, %vm786
    %v788 = vsel %vm787, %v779, %v784
    %v789 = vrsqrt.pop %v737
    %v790 = vmul.f32 %v789, %v737
    %v791 = vmul.f32 %v790, %v789
    %v792 = vmul.f32 0.5, %v791
    %v793 = vsub.f32 1.5, %v792
    %v794 = vmul.f32 %v789, %v793
    %vm795 = vweird.f32 %v737
    %vm796 = vweird.f32 %v789
    %vm797 = vmor %vm795, %vm796
    %v798 = vsel %vm797, %v789, %v794
    %v799 = vrsqrt.pop %v738
    %v800 = vmul.f32 %v799, %v738
    %v801 = vmul.f32 %v800, %v799
    %v802 = vmul.f32 0.5, %v801
    %v803 = vsub.f32 1.5, %v802
    %v804 = vmul.f32 %v799, %v803
    %vm805 = vweird.f32 %v738
    %vm806 = vweird.f32 %v799
    %vm807 = vmor %vm805, %vm806
    %v808 = vsel %vm807, %v799, %v804
    %v809 = vrsqrt.pop %v739
    %v810 = vmul.f32 %v809, %v739
    %v811 = vmul.f32 %v810, %v809
    %v812 = vmul.f32 0.5, %v811
    %v813 = vsub.f32 1.5, %v812
    %v814 = vmul.f32 %v809, %v813
    %vm815 = vweird.f32 %v739
    %vm816 = vweird.f32 %v809
    %vm817 = vmor %vm815, %vm816
    %v818 = vsel %vm817, %v809, %v814
    %v819 = vrsqrt.pop %v740
    %v820 = vmul.f32 %v819, %v740
    %v821 = vmul.f32 %v820, %v819
    %v822 = vmul.f32 0.5, %v821
    %v823 = vsub.f32 1.5, %v822
    %v824 = vmul.f32 %v819, %v823
    %vm825 = vweird.f32 %v740
    %vm826 = vweird.f32 %v819
    %vm827 = vmor %vm825, %vm826
    %v828 = vsel %vm827, %v819, %v824
    %v829 = vrsqrt.pop %v741
    %v830 = vmul.f32 %v829, %v741
    %v831 = vmul.f32 %v830, %v829
    %v832 = vmul.f32 0.5, %v831
    %v833 = vsub.f32 1.5, %v832
    %v834 = vmul.f32 %v829, %v833
    %vm835 = vweird.f32 %v741
    %vm836 = vweird.f32 %v829
    %vm837 = vmor %vm835, %vm836
    %v838 = vsel %vm837, %v829, %v834
    %v839 = vrsqrt.pop %v742
    %v840 = vmul.f32 %v839, %v742
    %v841 = vmul.f32 %v840, %v839
    %v842 = vmul.f32 0.5, %v841
    %v843 = vsub.f32 1.5, %v842
    %v844 = vmul.f32 %v839, %v843
    %vm845 = vweird.f32 %v742
    %vm846 = vweird.f32 %v839
    %vm847 = vmor %vm845, %vm846
    %v848 = vsel %vm847, %v839, %v844
    %v849 = vrsqrt.pop %v743
    %v850 = vmul.f32 %v849, %v743
    %v851 = vmul.f32 %v850, %v849
    %v852 = vmul.f32 0.5, %v851
    %v853 = vsub.f32 1.5, %v852
    %v854 = vmul.f32 %v849, %v853
    %vm855 = vweird.f32 %v743
    %vm856 = vweird.f32 %v849
    %vm857 = vmor %vm855, %vm856
    %v858 = vsel %vm857, %v849, %v854
    %v859 = vrsqrt.pop %v744
    %v860 = vmul.f32 %v859, %v744
    %v861 = vmul.f32 %v860, %v859
    %v862 = vmul.f32 0.5, %v861
    %v863 = vsub.f32 1.5, %v862
    %v864 = vmul.f32 %v859, %v863
    %vm865 = vweird.f32 %v744
    %vm866 = vweird.f32 %v859
    %vm867 = vmor %vm865, %vm866
    %v868 = vsel %vm867, %v859, %v864
    %v869 = vrsqrt.pop %v745
    %v870 = vmul.f32 %v869, %v745
    %v871 = vmul.f32 %v870, %v869
    %v872 = vmul.f32 0.5, %v871
    %v873 = vsub.f32 1.5, %v872
    %v874 = vmul.f32 %v869, %v873
    %vm875 = vweird.f32 %v745
    %vm876 = vweird.f32 %v869
    %vm877 = vmor %vm875, %vm876
    %v878 = vsel %vm877, %v869, %v874
    %v879 = vrsqrt.pop %v746
    %v880 = vmul.f32 %v879, %v746
    %v881 = vmul.f32 %v880, %v879
    %v882 = vmul.f32 0.5, %v881
    %v883 = vsub.f32 1.5, %v882
    %v884 = vmul.f32 %v879, %v883
    %vm885 = vweird.f32 %v746
    %vm886 = vweird.f32 %v879
    %vm887 = vmor %vm885, %vm886
    %v888 = vsel %vm887, %v879, %v884
    %v889 = vrsqrt.pop %v747
    %v890 = vmul.f32 %v889, %v747
    %v891 = vmul.f32 %v890, %v889
    %v892 = vmul.f32 0.5, %v891
    %v893 = vsub.f32 1.5, %v892
    %v894 = vmul.f32 %v889, %v893
    %vm895 = vweird.f32 %v747
    %vm896 = vweird.f32 %v889
    %vm897 = vmor %vm895, %vm896
    %v898 = vsel %vm897, %v889, %v894
    %v899 = vrsqrt.pop %v748
    %v900 = vmul.f32 %v899, %v748
    %v901 = vmul.f32 %v900, %v899
    %v902 = vmul.f32 0.5, %v901
    %v903 = vsub.f32 1.5, %v902
    %v904 = vmul.f32 %v899, %v903
    %vm905 = vweird.f32 %v748
    %vm906 = vweird.f32 %v899
    %vm907 = vmor %vm905, %vm906
    %v908 = vsel %vm907, %v899, %v904
    %v909 = vmul.f32 %v653, %v758
    %v910 = vmul.f32 %v654, %v768
    %v911 = vmul.f32 %v655, %v778
    %v912 = vmul.f32 %v656, %v788
    %v913 = vmul.f32 %v657, %v798
    %v914 = vmul.f32 %v658, %v808
    %v915 = vmul.f32 %v659, %v818
    %v916 = vmul.f32 %v660, %v828
    %v917 = vmul.f32 %v661, %v838
    %v918 = vmul.f32 %v662, %v848
    %v919 = vmul.f32 %v663, %v858
    %v920 = vmul.f32 %v664, %v868
    %v921 = vmul.f32 %v665, %v878
    %v922 = vmul.f32 %v666, %v888
    %v923 = vmul.f32 %v667, %v898
    %v924 = vmul.f32 %v668, %v908
    %v925 = vperm.slane %v82, 0
    %v926 = vmul.f32 %v909, %v925
    %v927 = vmul.f32 %v910, %v925
    %v928 = vmul.f32 %v911, %v925
    %v929 = vmul.f32 %v912, %v925
    %v930 = vmul.f32 %v913, %v925
    %v931 = vmul.f32 %v914, %v925
    %v932 = vmul.f32 %v915, %v925
    %v933 = vmul.f32 %v916, %v925
    %v934 = vmul.f32 %v917, %v925
    %v935 = vmul.f32 %v918, %v925
    %v936 = vmul.f32 %v919, %v925
    %v937 = vmul.f32 %v920, %v925
    %v938 = vmul.f32 %v921, %v925
    %v939 = vmul.f32 %v922, %v925
    %v940 = vmul.f32 %v923, %v925
    %v941 = vmul.f32 %v924, %v925
    %v942 = vperm.slane %v82, 1
    %v943 = vadd.f32 %v926, %v942
    %v944 = vadd.f32 %v927, %v942
    %v945 = vadd.f32 %v928, %v942
    %v946 = vadd.f32 %v929, %v942
    %v947 = vadd.f32 %v930, %v942
    %v948 = vadd.f32 %v931, %v942
    %v949 = vadd.f32 %v932, %v942
    %v950 = vadd.f32 %v933, %v942
    %v951 = vadd.f32 %v934, %v942
    %v952 = vadd.f32 %v935, %v942
    %v953 = vadd.f32 %v936, %v942
    %v954 = vadd.f32 %v937, %v942
    %v955 = vadd.f32 %v938, %v942
    %v956 = vadd.f32 %v939, %v942
    %v957 = vadd.f32 %v940, %v942
    %v958 = vadd.f32 %v941, %v942
    %v959 = vpack.c.bf16 %v943, %v943
    %v960 = vpack.c.bf16 %v944, %v944
    %v961 = vpack.c.bf16 %v945, %v945
    %v962 = vpack.c.bf16 %v946, %v946
    %v963 = vpack.c.bf16 %v947, %v947
    %v964 = vpack.c.bf16 %v948, %v948
    %v965 = vpack.c.bf16 %v949, %v949
    %v966 = vpack.c.bf16 %v950, %v950
    %v967 = vpack.c.bf16 %v951, %v951
    %v968 = vpack.c.bf16 %v952, %v952
    %v969 = vpack.c.bf16 %v953, %v953
    %v970 = vpack.c.bf16 %v954, %v954
    %v971 = vpack.c.bf16 %v955, %v955
    %v972 = vpack.c.bf16 %v956, %v956
    %v973 = vpack.c.bf16 %v957, %v957
    %v974 = vpack.c.bf16 %v958, %v958
    %975 = vst [vmem:[#allocation7] sm:$0xf] %v959
    %976 = vst [vmem:[#allocation7 + $0x4] sm:$0xf] %v960
    %977 = vst [vmem:[#allocation7 + $0x8] sm:$0xf] %v961
    %978 = vst [vmem:[#allocation7 + $0xc] sm:$0xf] %v962
    %979 = vst [vmem:[#allocation7 + $0x10] sm:$0xf] %v963
    %980 = vst [vmem:[#allocation7 + $0x14] sm:$0xf] %v964
    %981 = vst [vmem:[#allocation7 + $0x18] sm:$0xf] %v965
    %982 = vst [vmem:[#allocation7 + $0x1c] sm:$0xf] %v966
    %983 = vst [vmem:[#allocation7 + $0x20] sm:$0xf] %v967
    %984 = vst [vmem:[#allocation7 + $0x24] sm:$0xf] %v968
    %985 = vst [vmem:[#allocation7 + $0x28] sm:$0xf] %v969
    %986 = vst [vmem:[#allocation7 + $0x2c] sm:$0xf] %v970
    %987 = vst [vmem:[#allocation7 + $0x30] sm:$0xf] %v971
    %988 = vst [vmem:[#allocation7 + $0x34] sm:$0xf] %v972
    %989 = vst [vmem:[#allocation7 + $0x38] sm:$0xf] %v973
    %990 = vst [vmem:[#allocation7 + $0x3c] sm:$0xf] %v974
    // Predicated region
    $region26: #{tpu_custom_call.1} parent=1 // pred_check
      _
    $region27: #{tpu_custom_call.1} parent=1 // pred_check_branch
      %992 = sbr.rel (0) target = $region29
    $region28: #{tpu_custom_call.1} parent=1 // pred_region
      %994 = vsyncadd [#allocation4], 0
      %s995 = sshll.u32 [#allocation7], 4
      %s996 = int_to_ptr.vmem [resolvable:$true] %s995
      %s997 = sshll.u32 %s4, 4
      %s998 = int_to_ptr.hbm [resolvable:$true] %s997
      %1003 = dma.vmem_to_hbm [thread:$0]  %s996, 1024, %s998, [#allocation4], 64, 64, 4
    $region29: #{tpu_custom_call.1} parent=1 // pred_fallthru
      _
    // Predicated region
    $region30: #{tpu_custom_call.1} parent=1 // pred_check
      _
    $region31: #{tpu_custom_call.1} parent=1 // pred_check_branch
      %1005 = sbr.rel (0) target = $region33
    $region32: #{tpu_custom_call.1} parent=1 // pred_region
      %1007 = dma.done [#allocation4], 1024
    $region33: #{tpu_custom_call.1} parent=1 // pred_fallthru
      _
    %1008 = vsyncpa [#allocation3], 1
    %1009 = vsyncpa [#allocation6], 1
    %1010 = vsyncpa [#allocation4], 1

// kernel: tpu_custom_call.1
$region0: #{tpu_custom_call.1}
  #allocation0 [shape = 'u32[]', space=smem, size = 0x4, offset = 0x4, fixed_abs, tag = 'smem constant byte address 0x4 - core index']
  #allocation1 [shape = 'u32[72,128]{1,0:T(1,128)}', space=vmem, size = 0x9000, scoped, tag = 'internal scratch']
  %s0 = inlined_call_operand.hbm [shape: bf16[128,128], index: 0, kind: input, shape index: {}, may-alias: {0,4}]
  %s1 = inlined_call_operand.hbm [shape: bf16[3,128,128], index: 1, kind: input, shape index: {}]
  %s2 = inlined_call_operand.vmem [shape: f32[3,1,128], index: 2, kind: input, shape index: {}]
  %s3 = inlined_call_operand.vmem [shape: f32[2,128], index: 3, kind: input, shape index: {}]
  %s4 = inlined_call_operand.hbm [shape: bf16[128,128], index: 4, kind: output, shape index: {}, may-alias: {0,4}]
  %s5 = sld [smem:[#allocation0]]
  $region34: #{tpu_custom_call.1} parent=0
    _
  %s7 = ssub.s32 1, %s5
  %s8 = scalar_select 0, %s7, %s5
  $region1: #{tpu_custom_call.1} parent=0
    #allocation2 [shape = 'u8[32768]{0}', space=vmem, size = 0x8000, scoped, tag = 'input window, operand 0, single buffered']
    #allocation3 [shape = 's32[1]{0}', space=sflag, size = 0x4, scoped, tag = 'scoped memory for tpu_custom_call.1']
    #allocation4 [shape = 's32[1]{0}', space=sflag, size = 0x4, scoped, tag = 'scoped memory for tpu_custom_call.1']
    #allocation5 [shape = 'u8[98304]{0}', space=vmem, size = 0x18000, scoped, tag = 'input window, operand 1, single buffered']
    #allocation6 [shape = 's32[1]{0}', space=sflag, size = 0x4, scoped, tag = 'scoped memory for tpu_custom_call.1']
    #allocation7 [shape = 'u8[32768]{0}', space=vmem, size = 0x8000, scoped, tag = 'output window, operand 0, single buffered']
    %9 = vsyncpa [#allocation3], 0
    %10 = vsyncpa [#allocation6], 0
    %11 = vsyncpa [#allocation4], 0
    // Predicated region
    $region2: #{tpu_custom_call.1} parent=1 // pred_check
      _
    $region3: #{tpu_custom_call.1} parent=1 // pred_check_branch
      %13 = sbr.rel (0) target = $region5
    $region4: #{tpu_custom_call.1} parent=1 // pred_region
      %15 = vsyncadd [#allocation3], 0
      %s16 = sshll.u32 %s0, 4
      %s17 = int_to_ptr.hbm [resolvable:$true] %s16
      %s18 = sshll.u32 [#allocation2], 4
      %s19 = int_to_ptr.vmem [resolvable:$true] %s18
      %24 = dma.hbm_to_vmem [thread:$0]  %s17, 1024, %s19, [#allocation3], 64, 64, 4
    $region5: #{tpu_custom_call.1} parent=1 // pred_fallthru
      _
    // Predicated region
    $region6: #{tpu_custom_call.1} parent=1 // pred_check
      _
    $region7: #{tpu_custom_call.1} parent=1 // pred_check_branch
      %26 = sbr.rel (0) target = $region9
    $region8: #{tpu_custom_call.1} parent=1 // pred_region
      %28 = vsyncadd [#allocation6], 0
      %s29 = sshll.u32 %s1, 4
      %s30 = int_to_ptr.hbm [resolvable:$true] %s29
      %s31 = sshll.u32 [#allocation5], 4
      %s32 = int_to_ptr.vmem [resolvable:$true] %s31
      %37 = dma.hbm_to_vmem [thread:$0]  %s30, 3072, %s32, [#allocation6], 64, 64, 4
    $region9: #{tpu_custom_call.1} parent=1 // pred_fallthru
      _
    // Predicated region
    $region10: #{tpu_custom_call.1} parent=1 // pred_check
      _
    $region11: #{tpu_custom_call.1} parent=1 // pred_check_branch
      %39 = sbr.rel (0) target = $region13
    $region12: #{tpu_custom_call.1} parent=1 // pred_region
      _
    $region13: #{tpu_custom_call.1} parent=1 // pred_fallthru
      _
    // Predicated region
    $region14: #{tpu_custom_call.1} parent=1 // pred_check
      _
    $region15: #{tpu_custom_call.1} parent=1 // pred_check_branch
      %41 = sbr.rel (0) target = $region17
    $region16: #{tpu_custom_call.1} parent=1 // pred_region
      _
    $region17: #{tpu_custom_call.1} parent=1 // pred_fallthru
      _
    // Predicated region
    $region18: #{tpu_custom_call.1} parent=1 // pred_check
      _
    $region19: #{tpu_custom_call.1} parent=1 // pred_check_branch
      %43 = sbr.rel (0) target = $region21
    $region20: #{tpu_custom_call.1} parent=1 // pred_region
      %45 = dma.done [#allocation3], 1024
    $region21: #{tpu_custom_call.1} parent=1 // pred_fallthru
      _
    // Predicated region
    $region22: #{tpu_custom_call.1} parent=1 // pred_check
      _
    $region23: #{tpu_custom_call.1} parent=1 // pred_check_branch
      %47 = sbr.rel (0) target = $region25
    $region24: #{tpu_custom_call.1} parent=1 // pred_region
      %49 = dma.done [#allocation6], 3072
    $region25: #{tpu_custom_call.1} parent=1 // pred_fallthru
      _
    %v50 = vld [vmem:[#allocation2] sm:$0xf]
    %v51 = vld [vmem:[#allocation2 + $0x4] sm:$0xf]
    %v52 = vld [vmem:[#allocation2 + $0x8] sm:$0xf]
    %v53 = vld [vmem:[#allocation2 + $0xc] sm:$0xf]
    %v54 = vld [vmem:[#allocation2 + $0x10] sm:$0xf]
    %v55 = vld [vmem:[#allocation2 + $0x14] sm:$0xf]
    %v56 = vld [vmem:[#allocation2 + $0x18] sm:$0xf]
    %v57 = vld [vmem:[#allocation2 + $0x1c] sm:$0xf]
    %v58 = vld [vmem:[#allocation2 + $0x20] sm:$0xf]
    %v59 = vld [vmem:[#allocation2 + $0x24] sm:$0xf]
    %v60 = vld [vmem:[#allocation2 + $0x28] sm:$0xf]
    %v61 = vld [vmem:[#allocation2 + $0x2c] sm:$0xf]
    %v62 = vld [vmem:[#allocation2 + $0x30] sm:$0xf]
    %v63 = vld [vmem:[#allocation2 + $0x34] sm:$0xf]
    %v64 = vld [vmem:[#allocation2 + $0x38] sm:$0xf]
    %v65 = vld [vmem:[#allocation2 + $0x3c] sm:$0xf]
    %v66 = vunpack.c.l.bf16 %v50
    %v67 = vunpack.c.l.bf16 %v51
    %v68 = vunpack.c.l.bf16 %v52
    %v69 = vunpack.c.l.bf16 %v53
    %v70 = vunpack.c.l.bf16 %v54
    %v71 = vunpack.c.l.bf16 %v55
    %v72 = vunpack.c.l.bf16 %v56
    %v73 = vunpack.c.l.bf16 %v57
    %v74 = vunpack.c.l.bf16 %v58
    %v75 = vunpack.c.l.bf16 %v59
    %v76 = vunpack.c.l.bf16 %v60
    %v77 = vunpack.c.l.bf16 %v61
    %v78 = vunpack.c.l.bf16 %v62
    %v79 = vunpack.c.l.bf16 %v63
    %v80 = vunpack.c.l.bf16 %v64
    %v81 = vunpack.c.l.bf16 %v65
    %v82 = vld [vmem:[%s3] sm:$0x3]
    %v83 = vld [vmem:[#allocation5] sm:$0xf]
    %v84 = vld [vmem:[#allocation5 + $0x4] sm:$0xf]
    %v85 = vld [vmem:[#allocation5 + $0x8] sm:$0xf]
    %v86 = vld [vmem:[#allocation5 + $0xc] sm:$0xf]
    %v87 = vld [vmem:[#allocation5 + $0x10] sm:$0xf]
    %v88 = vld [vmem:[#allocation5 + $0x14] sm:$0xf]
    %v89 = vld [vmem:[#allocation5 + $0x18] sm:$0xf]
    %v90 = vld [vmem:[#allocation5 + $0x1c] sm:$0xf]
    %v91 = vld [vmem:[#allocation5 + $0x20] sm:$0xf]
    %v92 = vld [vmem:[#allocation5 + $0x24] sm:$0xf]
    %v93 = vld [vmem:[#allocation5 + $0x28] sm:$0xf]
    %v94 = vld [vmem:[#allocation5 + $0x2c] sm:$0xf]
    %v95 = vld [vmem:[#allocation5 + $0x30] sm:$0xf]
    %v96 = vld [vmem:[#allocation5 + $0x34] sm:$0xf]
    %v97 = vld [vmem:[#allocation5 + $0x38] sm:$0xf]
    %v98 = vld [vmem:[#allocation5 + $0x3c] sm:$0xf]
    %v99 = vld [vmem:[%s2] sm:$0x1]
    %v101 = vperm.slane %v99, 0
    %v119 = vunpack.c.l.b16 %v50
    %v120 = vunpack.c.l.b16 %v51
    %v121 = vunpack.c.l.b16 %v52
    %v122 = vunpack.c.l.b16 %v53
    %v123 = vunpack.c.l.b16 %v54
    %v124 = vunpack.c.l.b16 %v55
    %v125 = vunpack.c.l.b16 %v56
    %v126 = vunpack.c.l.b16 %v57
    %v127 = vunpack.c.l.b16 %v58
    %v128 = vunpack.c.l.b16 %v59
    %v129 = vunpack.c.l.b16 %v60
    %v130 = vunpack.c.l.b16 %v61
    %v131 = vunpack.c.l.b16 %v62
    %v132 = vunpack.c.l.b16 %v63
    %v133 = vunpack.c.l.b16 %v64
    %v134 = vunpack.c.l.b16 %v65
    %v135 = vpack.c.b16 %v120, %v119
    %v136 = vpack.c.b16 %v122, %v121
    %v137 = vpack.c.b16 %v124, %v123
    %v138 = vpack.c.b16 %v126, %v125
    %v139 = vpack.c.b16 %v128, %v127
    %v140 = vpack.c.b16 %v130, %v129
    %v141 = vpack.c.b16 %v132, %v131
    %v142 = vpack.c.b16 %v134, %v133
    %v167 = vunpack.c.l.b16 %v83
    %v168 = vunpack.c.l.b16 %v84
    %v169 = vunpack.c.l.b16 %v85
    %v170 = vunpack.c.l.b16 %v86
    %v171 = vunpack.c.l.b16 %v87
    %v172 = vunpack.c.l.b16 %v88
    %v173 = vunpack.c.l.b16 %v89
    %v174 = vunpack.c.l.b16 %v90
    %v175 = vunpack.c.l.b16 %v91
    %v176 = vunpack.c.l.b16 %v92
    %v177 = vunpack.c.l.b16 %v93
    %v178 = vunpack.c.l.b16 %v94
    %v179 = vunpack.c.l.b16 %v95
    %v180 = vunpack.c.l.b16 %v96
    %v181 = vunpack.c.l.b16 %v97
    %v182 = vunpack.c.l.b16 %v98
    %v183 = vpack.c.b16 %v168, %v167
    %v184 = vpack.c.b16 %v170, %v169
    %v185 = vpack.c.b16 %v172, %v171
    %v186 = vpack.c.b16 %v174, %v173
    %v187 = vpack.c.b16 %v176, %v175
    %v188 = vpack.c.b16 %v178, %v177
    %v189 = vpack.c.b16 %v180, %v179
    %v190 = vpack.c.b16 %v182, %v181
    %199 = vmatpush.bf16.msra.mxu0 %v190
    %200 = vmatpush.bf16.msra.mxu0 %v189
    %201 = vmatpush.bf16.msra.mxu0 %v188
    %202 = vmatpush.bf16.msra.mxu0 %v187
    %203 = vmatpush.bf16.msra.mxu0 %v186
    %204 = vmatpush.bf16.msra.mxu0 %v185
    %205 = vmatpush.bf16.msra.mxu0 %v184
    %206 = vmatpush.bf16.msra.mxu0 %v183
    %207 = vmatmul.bf16.gmra.mxu0 %v135
    %v208 = vpop.f32.mrf.mxu0
    %v209 = vadd.f32 %v101, %v208
    %v210 = vpop.f32.mrf.mxu0
    %v211 = vadd.f32 %v101, %v210
    %212 = vmatmul.bf16.gmra.mxu0 %v136
    %v213 = vpop.f32.mrf.mxu0
    %v214 = vadd.f32 %v101, %v213
    %v215 = vpop.f32.mrf.mxu0
    %v216 = vadd.f32 %v101, %v215
    %217 = vmatmul.bf16.gmra.mxu0 %v137
    %v218 = vpop.f32.mrf.mxu0
    %v219 = vadd.f32 %v101, %v218
    %v220 = vpop.f32.mrf.mxu0
    %v221 = vadd.f32 %v101, %v220
    %222 = vmatmul.bf16.gmra.mxu0 %v138
    %v223 = vpop.f32.mrf.mxu0
    %v224 = vadd.f32 %v101, %v223
    %v225 = vpop.f32.mrf.mxu0
    %v226 = vadd.f32 %v101, %v225
    %227 = vmatmul.bf16.gmra.mxu0 %v139
    %v228 = vpop.f32.mrf.mxu0
    %v229 = vadd.f32 %v101, %v228
    %v230 = vpop.f32.mrf.mxu0
    %v231 = vadd.f32 %v101, %v230
    %232 = vmatmul.bf16.gmra.mxu0 %v140
    %v233 = vpop.f32.mrf.mxu0
    %v234 = vadd.f32 %v101, %v233
    %v235 = vpop.f32.mrf.mxu0
    %v236 = vadd.f32 %v101, %v235
    %237 = vmatmul.bf16.gmra.mxu0 %v141
    %v238 = vpop.f32.mrf.mxu0
    %v239 = vadd.f32 %v101, %v238
    %v240 = vpop.f32.mrf.mxu0
    %v241 = vadd.f32 %v101, %v240
    %242 = vmatmul.bf16.gmra.mxu0 %v142
    %v243 = vpop.f32.mrf.mxu0
    %v244 = vadd.f32 %v101, %v243
    %v245 = vpop.f32.mrf.mxu0
    %v246 = vadd.f32 %v101, %v245
    %247 = vdwg.mxu0
    %v248 = vmax.f32 %v209, 0.0
    %v249 = vmax.f32 %v211, 0.0
    %v250 = vmax.f32 %v214, 0.0
    %v251 = vmax.f32 %v216, 0.0
    %v252 = vmax.f32 %v219, 0.0
    %v253 = vmax.f32 %v221, 0.0
    %v254 = vmax.f32 %v224, 0.0
    %v255 = vmax.f32 %v226, 0.0
    %v256 = vmax.f32 %v229, 0.0
    %v257 = vmax.f32 %v231, 0.0
    %v258 = vmax.f32 %v234, 0.0
    %v259 = vmax.f32 %v236, 0.0
    %v260 = vmax.f32 %v239, 0.0
    %v261 = vmax.f32 %v241, 0.0
    %v262 = vmax.f32 %v244, 0.0
    %v263 = vmax.f32 %v246, 0.0
    %v264 = vadd.f32 %v66, %v248
    %v265 = vadd.f32 %v67, %v249
    %v266 = vadd.f32 %v68, %v250
    %v267 = vadd.f32 %v69, %v251
    %v268 = vadd.f32 %v70, %v252
    %v269 = vadd.f32 %v71, %v253
    %v270 = vadd.f32 %v72, %v254
    %v271 = vadd.f32 %v73, %v255
    %v272 = vadd.f32 %v74, %v256
    %v273 = vadd.f32 %v75, %v257
    %v274 = vadd.f32 %v76, %v258
    %v275 = vadd.f32 %v77, %v259
    %v276 = vadd.f32 %v78, %v260
    %v277 = vadd.f32 %v79, %v261
    %v278 = vadd.f32 %v80, %v262
    %v279 = vadd.f32 %v81, %v263
    %s280 = scalar_lea.vmem [#allocation5], 64
    %v281 = vld [vmem:[%s280] sm:$0xf]
    %v282 = vld [vmem:[%s280 + $0x4] sm:$0xf]
    %v283 = vld [vmem:[%s280 + $0x8] sm:$0xf]
    %v284 = vld [vmem:[%s280 + $0xc] sm:$0xf]
    %v285 = vld [vmem:[%s280 + $0x10] sm:$0xf]
    %v286 = vld [vmem:[%s280 + $0x14] sm:$0xf]
    %v287 = vld [vmem:[%s280 + $0x18] sm:$0xf]
    %v288 = vld [vmem:[%s280 + $0x1c] sm:$0xf]
    %v289 = vld [vmem:[%s280 + $0x20] sm:$0xf]
    %v290 = vld [vmem:[%s280 + $0x24] sm:$0xf]
    %v291 = vld [vmem:[%s280 + $0x28] sm:$0xf]
    %v292 = vld [vmem:[%s280 + $0x2c] sm:$0xf]
    %v293 = vld [vmem:[%s280 + $0x30] sm:$0xf]
    %v294 = vld [vmem:[%s280 + $0x34] sm:$0xf]
    %v295 = vld [vmem:[%s280 + $0x38] sm:$0xf]
    %v296 = vld [vmem:[%s280 + $0x3c] sm:$0xf]
    %s297 = scalar_lea.vmem %s2, 1
    %v298 = vld [vmem:[%s297] sm:$0x1]
    %v299 = vpack.c.bf16 %v265, %v264
    %v300 = vpack.c.bf16 %v267, %v266
    %v301 = vpack.c.bf16 %v269, %v268
    %v302 = vpack.c.bf16 %v271, %v270
    %v303 = vpack.c.bf16 %v273, %v272
    %v304 = vpack.c.bf16 %v275, %v274
    %v305 = vpack.c.bf16 %v277, %v276
    %v306 = vpack.c.bf16 %v279, %v278
    %v308 = vperm.slane %v298, 0
    %v326 = vunpack.c.l.b16 %v281
    %v327 = vunpack.c.l.b16 %v282
    %v328 = vunpack.c.l.b16 %v283
    %v329 = vunpack.c.l.b16 %v284
    %v330 = vunpack.c.l.b16 %v285
    %v331 = vunpack.c.l.b16 %v286
    %v332 = vunpack.c.l.b16 %v287
    %v333 = vunpack.c.l.b16 %v288
    %v334 = vunpack.c.l.b16 %v289
    %v335 = vunpack.c.l.b16 %v290
    %v336 = vunpack.c.l.b16 %v291
    %v337 = vunpack.c.l.b16 %v292
    %v338 = vunpack.c.l.b16 %v293
    %v339 = vunpack.c.l.b16 %v294
    %v340 = vunpack.c.l.b16 %v295
    %v341 = vunpack.c.l.b16 %v296
    %v342 = vpack.c.b16 %v327, %v326
    %v343 = vpack.c.b16 %v329, %v328
    %v344 = vpack.c.b16 %v331, %v330
    %v345 = vpack.c.b16 %v333, %v332
    %v346 = vpack.c.b16 %v335, %v334
    %v347 = vpack.c.b16 %v337, %v336
    %v348 = vpack.c.b16 %v339, %v338
    %v349 = vpack.c.b16 %v341, %v340
    %358 = vmatpush.bf16.msra.mxu0 %v349
    %359 = vmatpush.bf16.msra.mxu0 %v348
    %360 = vmatpush.bf16.msra.mxu0 %v347
    %361 = vmatpush.bf16.msra.mxu0 %v346
    %362 = vmatpush.bf16.msra.mxu0 %v345
    %363 = vmatpush.bf16.msra.mxu0 %v344
    %364 = vmatpush.bf16.msra.mxu0 %v343
    %365 = vmatpush.bf16.msra.mxu0 %v342
    %366 = vmatmul.bf16.gmra.mxu0 %v299
    %v367 = vpop.f32.mrf.mxu0
    %v368 = vadd.f32 %v308, %v367
    %v369 = vpop.f32.mrf.mxu0
    %v370 = vadd.f32 %v308, %v369
    %371 = vmatmul.bf16.gmra.mxu0 %v300
    %v372 = vpop.f32.mrf.mxu0
    %v373 = vadd.f32 %v308, %v372
    %v374 = vpop.f32.mrf.mxu0
    %v375 = vadd.f32 %v308, %v374
    %376 = vmatmul.bf16.gmra.mxu0 %v301
    %v377 = vpop.f32.mrf.mxu0
    %v378 = vadd.f32 %v308, %v377
    %v379 = vpop.f32.mrf.mxu0
    %v380 = vadd.f32 %v308, %v379
    %381 = vmatmul.bf16.gmra.mxu0 %v302
    %v382 = vpop.f32.mrf.mxu0
    %v383 = vadd.f32 %v308, %v382
    %v384 = vpop.f32.mrf.mxu0
    %v385 = vadd.f32 %v308, %v384
    %386 = vmatmul.bf16.gmra.mxu0 %v303
    %v387 = vpop.f32.mrf.mxu0
    %v388 = vadd.f32 %v308, %v387
    %v389 = vpop.f32.mrf.mxu0
    %v390 = vadd.f32 %v308, %v389
    %391 = vmatmul.bf16.gmra.mxu0 %v304
    %v392 = vpop.f32.mrf.mxu0
    %v393 = vadd.f32 %v308, %v392
    %v394 = vpop.f32.mrf.mxu0
    %v395 = vadd.f32 %v308, %v394
    %396 = vmatmul.bf16.gmra.mxu0 %v305
    %v397 = vpop.f32.mrf.mxu0
    %v398 = vadd.f32 %v308, %v397
    %v399 = vpop.f32.mrf.mxu0
    %v400 = vadd.f32 %v308, %v399
    %401 = vmatmul.bf16.gmra.mxu0 %v306
    %v402 = vpop.f32.mrf.mxu0
    %v403 = vadd.f32 %v308, %v402
    %v404 = vpop.f32.mrf.mxu0
    %v405 = vadd.f32 %v308, %v404
    %406 = vdwg.mxu0
    %v407 = vmax.f32 %v368, 0.0
    %v408 = vmax.f32 %v370, 0.0
    %v409 = vmax.f32 %v373, 0.0
    %v410 = vmax.f32 %v375, 0.0
    %v411 = vmax.f32 %v378, 0.0
    %v412 = vmax.f32 %v380, 0.0
    %v413 = vmax.f32 %v383, 0.0
    %v414 = vmax.f32 %v385, 0.0
    %v415 = vmax.f32 %v388, 0.0
    %v416 = vmax.f32 %v390, 0.0
    %v417 = vmax.f32 %v393, 0.0
    %v418 = vmax.f32 %v395, 0.0
    %v419 = vmax.f32 %v398, 0.0
    %v420 = vmax.f32 %v400, 0.0
    %v421 = vmax.f32 %v403, 0.0
    %v422 = vmax.f32 %v405, 0.0
    %v423 = vadd.f32 %v264, %v407
    %v424 = vadd.f32 %v265, %v408
    %v425 = vadd.f32 %v266, %v409
    %v426 = vadd.f32 %v267, %v410
    %v427 = vadd.f32 %v268, %v411
    %v428 = vadd.f32 %v269, %v412
    %v429 = vadd.f32 %v270, %v413
    %v430 = vadd.f32 %v271, %v414
    %v431 = vadd.f32 %v272, %v415
    %v432 = vadd.f32 %v273, %v416
    %v433 = vadd.f32 %v274, %v417
    %v434 = vadd.f32 %v275, %v418
    %v435 = vadd.f32 %v276, %v419
    %v436 = vadd.f32 %v277, %v420
    %v437 = vadd.f32 %v278, %v421
    %v438 = vadd.f32 %v279, %v422
    %s439 = scalar_lea.vmem [#allocation5], 128
    %v440 = vld [vmem:[%s439] sm:$0xf]
    %v441 = vld [vmem:[%s439 + $0x4] sm:$0xf]
    %v442 = vld [vmem:[%s439 + $0x8] sm:$0xf]
    %v443 = vld [vmem:[%s439 + $0xc] sm:$0xf]
    %v444 = vld [vmem:[%s439 + $0x10] sm:$0xf]
    %v445 = vld [vmem:[%s439 + $0x14] sm:$0xf]
    %v446 = vld [vmem:[%s439 + $0x18] sm:$0xf]
    %v447 = vld [vmem:[%s439 + $0x1c] sm:$0xf]
    %v448 = vld [vmem:[%s439 + $0x20] sm:$0xf]
    %v449 = vld [vmem:[%s439 + $0x24] sm:$0xf]
    %v450 = vld [vmem:[%s439 + $0x28] sm:$0xf]
    %v451 = vld [vmem:[%s439 + $0x2c] sm:$0xf]
    %v452 = vld [vmem:[%s439 + $0x30] sm:$0xf]
    %v453 = vld [vmem:[%s439 + $0x34] sm:$0xf]
    %v454 = vld [vmem:[%s439 + $0x38] sm:$0xf]
    %v455 = vld [vmem:[%s439 + $0x3c] sm:$0xf]
    %s456 = scalar_lea.vmem %s2, 2
    %v457 = vld [vmem:[%s456] sm:$0x1]
    %v458 = vpack.c.bf16 %v424, %v423
    %v459 = vpack.c.bf16 %v426, %v425
    %v460 = vpack.c.bf16 %v428, %v427
    %v461 = vpack.c.bf16 %v430, %v429
    %v462 = vpack.c.bf16 %v432, %v431
    %v463 = vpack.c.bf16 %v434, %v433
    %v464 = vpack.c.bf16 %v436, %v435
    %v465 = vpack.c.bf16 %v438, %v437
    %v467 = vperm.slane %v457, 0
    %v485 = vunpack.c.l.b16 %v440
    %v486 = vunpack.c.l.b16 %v441
    %v487 = vunpack.c.l.b16 %v442
    %v488 = vunpack.c.l.b16 %v443
    %v489 = vunpack.c.l.b16 %v444
    %v490 = vunpack.c.l.b16 %v445
    %v491 = vunpack.c.l.b16 %v446
    %v492 = vunpack.c.l.b16 %v447
    %v493 = vunpack.c.l.b16 %v448
    %v494 = vunpack.c.l.b16 %v449
    %v495 = vunpack.c.l.b16 %v450
    %v496 = vunpack.c.l.b16 %v451
    %v497 = vunpack.c.l.b16 %v452
    %v498 = vunpack.c.l.b16 %v453
    %v499 = vunpack.c.l.b16 %v454
    %v500 = vunpack.c.l.b16 %v455
    %v501 = vpack.c.b16 %v486, %v485
    %v502 = vpack.c.b16 %v488, %v487
    %v503 = vpack.c.b16 %v490, %v489
    %v504 = vpack.c.b16 %v492, %v491
    %v505 = vpack.c.b16 %v494, %v493
    %v506 = vpack.c.b16 %v496, %v495
    %v507 = vpack.c.b16 %v498, %v497
    %v508 = vpack.c.b16 %v500, %v499
    %517 = vmatpush.bf16.msra.mxu0 %v508
    %518 = vmatpush.bf16.msra.mxu0 %v507
    %519 = vmatpush.bf16.msra.mxu0 %v506
    %520 = vmatpush.bf16.msra.mxu0 %v505
    %521 = vmatpush.bf16.msra.mxu0 %v504
    %522 = vmatpush.bf16.msra.mxu0 %v503
    %523 = vmatpush.bf16.msra.mxu0 %v502
    %524 = vmatpush.bf16.msra.mxu0 %v501
    %525 = vmatmul.bf16.gmra.mxu0 %v458
    %v526 = vpop.f32.mrf.mxu0
    %v527 = vadd.f32 %v467, %v526
    %v528 = vpop.f32.mrf.mxu0
    %v529 = vadd.f32 %v467, %v528
    %530 = vmatmul.bf16.gmra.mxu0 %v459
    %v531 = vpop.f32.mrf.mxu0
    %v532 = vadd.f32 %v467, %v531
    %v533 = vpop.f32.mrf.mxu0
    %v534 = vadd.f32 %v467, %v533
    %535 = vmatmul.bf16.gmra.mxu0 %v460
    %v536 = vpop.f32.mrf.mxu0
    %v537 = vadd.f32 %v467, %v536
    %v538 = vpop.f32.mrf.mxu0
    %v539 = vadd.f32 %v467, %v538
    %540 = vmatmul.bf16.gmra.mxu0 %v461
    %v541 = vpop.f32.mrf.mxu0
    %v542 = vadd.f32 %v467, %v541
    %v543 = vpop.f32.mrf.mxu0
    %v544 = vadd.f32 %v467, %v543
    %545 = vmatmul.bf16.gmra.mxu0 %v462
    %v546 = vpop.f32.mrf.mxu0
    %v547 = vadd.f32 %v467, %v546
    %v548 = vpop.f32.mrf.mxu0
    %v549 = vadd.f32 %v467, %v548
    %550 = vmatmul.bf16.gmra.mxu0 %v463
    %v551 = vpop.f32.mrf.mxu0
    %v552 = vadd.f32 %v467, %v551
    %v553 = vpop.f32.mrf.mxu0
    %v554 = vadd.f32 %v467, %v553
    %555 = vmatmul.bf16.gmra.mxu0 %v464
    %v556 = vpop.f32.mrf.mxu0
    %v557 = vadd.f32 %v467, %v556
    %v558 = vpop.f32.mrf.mxu0
    %v559 = vadd.f32 %v467, %v558
    %560 = vmatmul.bf16.gmra.mxu0 %v465
    %v561 = vpop.f32.mrf.mxu0
    %v562 = vadd.f32 %v467, %v561
    %v563 = vpop.f32.mrf.mxu0
    %v564 = vadd.f32 %v467, %v563
    %565 = vdwg.mxu0
    %v566 = vmax.f32 %v527, 0.0
    %v567 = vmax.f32 %v529, 0.0
    %v568 = vmax.f32 %v532, 0.0
    %v569 = vmax.f32 %v534, 0.0
    %v570 = vmax.f32 %v537, 0.0
    %v571 = vmax.f32 %v539, 0.0
    %v572 = vmax.f32 %v542, 0.0
    %v573 = vmax.f32 %v544, 0.0
    %v574 = vmax.f32 %v547, 0.0
    %v575 = vmax.f32 %v549, 0.0
    %v576 = vmax.f32 %v552, 0.0
    %v577 = vmax.f32 %v554, 0.0
    %v578 = vmax.f32 %v557, 0.0
    %v579 = vmax.f32 %v559, 0.0
    %v580 = vmax.f32 %v562, 0.0
    %v581 = vmax.f32 %v564, 0.0
    %v582 = vadd.f32 %v423, %v566
    %v583 = vadd.f32 %v424, %v567
    %v584 = vadd.f32 %v425, %v568
    %v585 = vadd.f32 %v426, %v569
    %v586 = vadd.f32 %v427, %v570
    %v587 = vadd.f32 %v428, %v571
    %v588 = vadd.f32 %v429, %v572
    %v589 = vadd.f32 %v430, %v573
    %v590 = vadd.f32 %v431, %v574
    %v591 = vadd.f32 %v432, %v575
    %v592 = vadd.f32 %v433, %v576
    %v593 = vadd.f32 %v434, %v577
    %v594 = vadd.f32 %v435, %v578
    %v595 = vadd.f32 %v436, %v579
    %v596 = vadd.f32 %v437, %v580
    %v597 = vadd.f32 %v438, %v581
    %598 = vadd.xlane.f32.xlu0 %v582
    %v599 = vpop.xlane.xlu0 %598
    %600 = vadd.xlane.f32.xlu0 %v583
    %v601 = vpop.xlane.xlu0 %600
    %602 = vadd.xlane.f32.xlu0 %v584
    %v603 = vpop.xlane.xlu0 %602
    %604 = vadd.xlane.f32.xlu0 %v585
    %v605 = vpop.xlane.xlu0 %604
    %606 = vadd.xlane.f32.xlu0 %v586
    %v607 = vpop.xlane.xlu0 %606
    %608 = vadd.xlane.f32.xlu0 %v587
    %v609 = vpop.xlane.xlu0 %608
    %610 = vadd.xlane.f32.xlu0 %v588
    %v611 = vpop.xlane.xlu0 %610
    %612 = vadd.xlane.f32.xlu0 %v589
    %v613 = vpop.xlane.xlu0 %612
    %614 = vadd.xlane.f32.xlu0 %v590
    %v615 = vpop.xlane.xlu0 %614
    %616 = vadd.xlane.f32.xlu0 %v591
    %v617 = vpop.xlane.xlu0 %616
    %618 = vadd.xlane.f32.xlu0 %v592
    %v619 = vpop.xlane.xlu0 %618
    %620 = vadd.xlane.f32.xlu0 %v593
    %v621 = vpop.xlane.xlu0 %620
    %622 = vadd.xlane.f32.xlu0 %v594
    %v623 = vpop.xlane.xlu0 %622
    %624 = vadd.xlane.f32.xlu0 %v595
    %v625 = vpop.xlane.xlu0 %624
    %626 = vadd.xlane.f32.xlu0 %v596
    %v627 = vpop.xlane.xlu0 %626
    %628 = vadd.xlane.f32.xlu0 %v597
    %v629 = vpop.xlane.xlu0 %628
    %v630 = vrcp.pop 128.0
    %v631 = vmul.f32 128.0, %v630
    %v632 = vsub.f32 1.0, %v631
    %v633 = vmul.f32 %v630, %v632
    %v634 = vadd.f32 %v630, %v633
    %vm635 = vweird.f32 %v630
    %v636 = vsel %vm635, %v630, %v634
    %v637 = vmul.f32 %v599, %v636
    %v638 = vmul.f32 %v601, %v636
    %v639 = vmul.f32 %v603, %v636
    %v640 = vmul.f32 %v605, %v636
    %v641 = vmul.f32 %v607, %v636
    %v642 = vmul.f32 %v609, %v636
    %v643 = vmul.f32 %v611, %v636
    %v644 = vmul.f32 %v613, %v636
    %v645 = vmul.f32 %v615, %v636
    %v646 = vmul.f32 %v617, %v636
    %v647 = vmul.f32 %v619, %v636
    %v648 = vmul.f32 %v621, %v636
    %v649 = vmul.f32 %v623, %v636
    %v650 = vmul.f32 %v625, %v636
    %v651 = vmul.f32 %v627, %v636
    %v652 = vmul.f32 %v629, %v636
    %v653 = vsub.f32 %v582, %v637
    %v654 = vsub.f32 %v583, %v638
    %v655 = vsub.f32 %v584, %v639
    %v656 = vsub.f32 %v585, %v640
    %v657 = vsub.f32 %v586, %v641
    %v658 = vsub.f32 %v587, %v642
    %v659 = vsub.f32 %v588, %v643
    %v660 = vsub.f32 %v589, %v644
    %v661 = vsub.f32 %v590, %v645
    %v662 = vsub.f32 %v591, %v646
    %v663 = vsub.f32 %v592, %v647
    %v664 = vsub.f32 %v593, %v648
    %v665 = vsub.f32 %v594, %v649
    %v666 = vsub.f32 %v595, %v650
    %v667 = vsub.f32 %v596, %v651
    %v668 = vsub.f32 %v597, %v652
    %v669 = vmul.f32 %v653, %v653
    %v670 = vmul.f32 %v654, %v654
    %v671 = vmul.f32 %v655, %v655
    %v672 = vmul.f32 %v656, %v656
    %v673 = vmul.f32 %v657, %v657
    %v674 = vmul.f32 %v658, %v658
    %v675 = vmul.f32 %v659, %v659
    %v676 = vmul.f32 %v660, %v660
    %v677 = vmul.f32 %v661, %v661
    %v678 = vmul.f32 %v662, %v662
    %v679 = vmul.f32 %v663, %v663
    %v680 = vmul.f32 %v664, %v664
    %v681 = vmul.f32 %v665, %v665
    %v682 = vmul.f32 %v666, %v666
    %v683 = vmul.f32 %v667, %v667
    %v684 = vmul.f32 %v668, %v668
    %685 = vadd.xlane.f32.xlu0 %v669
    %v686 = vpop.xlane.xlu0 %685
    %687 = vadd.xlane.f32.xlu0 %v670
    %v688 = vpop.xlane.xlu0 %687
    %689 = vadd.xlane.f32.xlu0 %v671
    %v690 = vpop.xlane.xlu0 %689
    %691 = vadd.xlane.f32.xlu0 %v672
    %v692 = vpop.xlane.xlu0 %691
    %693 = vadd.xlane.f32.xlu0 %v673
    %v694 = vpop.xlane.xlu0 %693
    %695 = vadd.xlane.f32.xlu0 %v674
    %v696 = vpop.xlane.xlu0 %695
    %697 = vadd.xlane.f32.xlu0 %v675
    %v698 = vpop.xlane.xlu0 %697
    %699 = vadd.xlane.f32.xlu0 %v676
    %v700 = vpop.xlane.xlu0 %699
    %701 = vadd.xlane.f32.xlu0 %v677
    %v702 = vpop.xlane.xlu0 %701
    %703 = vadd.xlane.f32.xlu0 %v678
    %v704 = vpop.xlane.xlu0 %703
    %705 = vadd.xlane.f32.xlu0 %v679
    %v706 = vpop.xlane.xlu0 %705
    %707 = vadd.xlane.f32.xlu0 %v680
    %v708 = vpop.xlane.xlu0 %707
    %709 = vadd.xlane.f32.xlu0 %v681
    %v710 = vpop.xlane.xlu0 %709
    %711 = vadd.xlane.f32.xlu0 %v682
    %v712 = vpop.xlane.xlu0 %711
    %713 = vadd.xlane.f32.xlu0 %v683
    %v714 = vpop.xlane.xlu0 %713
    %715 = vadd.xlane.f32.xlu0 %v684
    %v716 = vpop.xlane.xlu0 %715
    %v717 = vmul.f32 %v686, %v636
    %v718 = vmul.f32 %v688, %v636
    %v719 = vmul.f32 %v690, %v636
    %v720 = vmul.f32 %v692, %v636
    %v721 = vmul.f32 %v694, %v636
    %v722 = vmul.f32 %v696, %v636
    %v723 = vmul.f32 %v698, %v636
    %v724 = vmul.f32 %v700, %v636
    %v725 = vmul.f32 %v702, %v636
    %v726 = vmul.f32 %v704, %v636
    %v727 = vmul.f32 %v706, %v636
    %v728 = vmul.f32 %v708, %v636
    %v729 = vmul.f32 %v710, %v636
    %v730 = vmul.f32 %v712, %v636
    %v731 = vmul.f32 %v714, %v636
    %v732 = vmul.f32 %v716, %v636
    %v733 = vadd.f32 %v717, 1e-05
    %v734 = vadd.f32 %v718, 1e-05
    %v735 = vadd.f32 %v719, 1e-05
    %v736 = vadd.f32 %v720, 1e-05
    %v737 = vadd.f32 %v721, 1e-05
    %v738 = vadd.f32 %v722, 1e-05
    %v739 = vadd.f32 %v723, 1e-05
    %v740 = vadd.f32 %v724, 1e-05
    %v741 = vadd.f32 %v725, 1e-05
    %v742 = vadd.f32 %v726, 1e-05
    %v743 = vadd.f32 %v727, 1e-05
    %v744 = vadd.f32 %v728, 1e-05
    %v745 = vadd.f32 %v729, 1e-05
    %v746 = vadd.f32 %v730, 1e-05
    %v747 = vadd.f32 %v731, 1e-05
    %v748 = vadd.f32 %v732, 1e-05
    %v749 = vrsqrt.pop %v733
    %v750 = vmul.f32 %v749, %v733
    %v751 = vmul.f32 %v750, %v749
    %v752 = vmul.f32 0.5, %v751
    %v753 = vsub.f32 1.5, %v752
    %v754 = vmul.f32 %v749, %v753
    %vm755 = vweird.f32 %v733
    %vm756 = vweird.f32 %v749
    %vm757 = vmor %vm755, %vm756
    %v758 = vsel %vm757, %v749, %v754
    %v759 = vrsqrt.pop %v734
    %v760 = vmul.f32 %v759, %v734
    %v761 = vmul.f32 %v760, %v759
    %v762 = vmul.f32 0.5, %v761
    %v763 = vsub.f32 1.5, %v762
    %v764 = vmul.f32 %v759, %v763
    %vm765 = vweird.f32 %v734
    %vm766 = vweird.f32 %v759
    %vm767 = vmor %vm765, %vm766
    %v768 = vsel %vm767, %v759, %v764
    %v769 = vrsqrt.pop %v735
    %v770 = vmul.f32 %v769, %v735
    %v771 = vmul.f32 %v770, %v769
    %v772 = vmul.f32 0.5, %v771
    %v773 = vsub.f32 1.5, %v772
    %v774 = vmul.f32 %v769, %v773
    %vm775 = vweird.f32 %v735
    %vm776 = vweird.f32 %v769
    %vm777 = vmor %vm775, %vm776
    %v778 = vsel %vm777, %v769, %v774
    %v779 = vrsqrt.pop %v736
    %v780 = vmul.f32 %v779, %v736
    %v781 = vmul.f32 %v780, %v779
    %v782 = vmul.f32 0.5, %v781
    %v783 = vsub.f32 1.5, %v782
    %v784 = vmul.f32 %v779, %v783
    %vm785 = vweird.f32 %v736
    %vm786 = vweird.f32 %v779
    %vm787 = vmor %vm785, %vm786
    %v788 = vsel %vm787, %v779, %v784
    %v789 = vrsqrt.pop %v737
    %v790 = vmul.f32 %v789, %v737
    %v791 = vmul.f32 %v790, %v789
    %v792 = vmul.f32 0.5, %v791
    %v793 = vsub.f32 1.5, %v792
    %v794 = vmul.f32 %v789, %v793
    %vm795 = vweird.f32 %v737
    %vm796 = vweird.f32 %v789
    %vm797 = vmor %vm795, %vm796
    %v798 = vsel %vm797, %v789, %v794
    %v799 = vrsqrt.pop %v738
    %v800 = vmul.f32 %v799, %v738
    %v801 = vmul.f32 %v800, %v799
    %v802 = vmul.f32 0.5, %v801
    %v803 = vsub.f32 1.5, %v802
    %v804 = vmul.f32 %v799, %v803
    %vm805 = vweird.f32 %v738
    %vm806 = vweird.f32 %v799
    %vm807 = vmor %vm805, %vm806
    %v808 = vsel %vm807, %v799, %v804
    %v809 = vrsqrt.pop %v739
    %v810 = vmul.f32 %v809, %v739
    %v811 = vmul.f32 %v810, %v809
    %v812 = vmul.f32 0.5, %v811
    %v813 = vsub.f32 1.5, %v812
    %v814 = vmul.f32 %v809, %v813
    %vm815 = vweird.f32 %v739
    %vm816 = vweird.f32 %v809
    %vm817 = vmor %vm815, %vm816
    %v818 = vsel %vm817, %v809, %v814
    %v819 = vrsqrt.pop %v740
    %v820 = vmul.f32 %v819, %v740
    %v821 = vmul.f32 %v820, %v819
    %v822 = vmul.f32 0.5, %v821
    %v823 = vsub.f32 1.5, %v822
    %v824 = vmul.f32 %v819, %v823
    %vm825 = vweird.f32 %v740
    %vm826 = vweird.f32 %v819
    %vm827 = vmor %vm825, %vm826
    %v828 = vsel %vm827, %v819, %v824
    %v829 = vrsqrt.pop %v741
    %v830 = vmul.f32 %v829, %v741
    %v831 = vmul.f32 %v830, %v829
    %v832 = vmul.f32 0.5, %v831
    %v833 = vsub.f32 1.5, %v832
    %v834 = vmul.f32 %v829, %v833
    %vm835 = vweird.f32 %v741
    %vm836 = vweird.f32 %v829
    %vm837 = vmor %vm835, %vm836
    %v838 = vsel %vm837, %v829, %v834
    %v839 = vrsqrt.pop %v742
    %v840 = vmul.f32 %v839, %v742
    %v841 = vmul.f32 %v840, %v839
    %v842 = vmul.f32 0.5, %v841
    %v843 = vsub.f32 1.5, %v842
    %v844 = vmul.f32 %v839, %v843
    %vm845 = vweird.f32 %v742
    %vm846 = vweird.f32 %v839
    %vm847 = vmor %vm845, %vm846
    %v848 = vsel %vm847, %v839, %v844
    %v849 = vrsqrt.pop %v743
    %v850 = vmul.f32 %v849, %v743
    %v851 = vmul.f32 %v850, %v849
    %v852 = vmul.f32 0.5, %v851
    %v853 = vsub.f32 1.5, %v852
    %v854 = vmul.f32 %v849, %v853
    %vm855 = vweird.f32 %v743
    %vm856 = vweird.f32 %v849
    %vm857 = vmor %vm855, %vm856
    %v858 = vsel %vm857, %v849, %v854
    %v859 = vrsqrt.pop %v744
    %v860 = vmul.f32 %v859, %v744
    %v861 = vmul.f32 %v860, %v859
    %v862 = vmul.f32 0.5, %v861
    %v863 = vsub.f32 1.5, %v862
    %v864 = vmul.f32 %v859, %v863
    %vm865 = vweird.f32 %v744
    %vm866 = vweird.f32 %v859
    %vm867 = vmor %vm865, %vm866
    %v868 = vsel %vm867, %v859, %v864
    %v869 = vrsqrt.pop %v745
    %v870 = vmul.f32 %v869, %v745
    %v871 = vmul.f32 %v870, %v869
    %v872 = vmul.f32 0.5, %v871
    %v873 = vsub.f32 1.5, %v872
    %v874 = vmul.f32 %v869, %v873
    %vm875 = vweird.f32 %v745
    %vm876 = vweird.f32 %v869
    %vm877 = vmor %vm875, %vm876
    %v878 = vsel %vm877, %v869, %v874
    %v879 = vrsqrt.pop %v746
    %v880 = vmul.f32 %v879, %v746
    %v881 = vmul.f32 %v880, %v879
    %v882 = vmul.f32 0.5, %v881
    %v883 = vsub.f32 1.5, %v882
    %v884 = vmul.f32 %v879, %v883
    %vm885 = vweird.f32 %v746
    %vm886 = vweird.f32 %v879
    %vm887 = vmor %vm885, %vm886
    %v888 = vsel %vm887, %v879, %v884
    %v889 = vrsqrt.pop %v747
    %v890 = vmul.f32 %v889, %v747
    %v891 = vmul.f32 %v890, %v889
    %v892 = vmul.f32 0.5, %v891
    %v893 = vsub.f32 1.5, %v892
    %v894 = vmul.f32 %v889, %v893
    %vm895 = vweird.f32 %v747
    %vm896 = vweird.f32 %v889
    %vm897 = vmor %vm895, %vm896
    %v898 = vsel %vm897, %v889, %v894
    %v899 = vrsqrt.pop %v748
    %v900 = vmul.f32 %v899, %v748
    %v901 = vmul.f32 %v900, %v899
    %v902 = vmul.f32 0.5, %v901
    %v903 = vsub.f32 1.5, %v902
    %v904 = vmul.f32 %v899, %v903
    %vm905 = vweird.f32 %v748
    %vm906 = vweird.f32 %v899
    %vm907 = vmor %vm905, %vm906
    %v908 = vsel %vm907, %v899, %v904
    %v909 = vmul.f32 %v653, %v758
    %v910 = vmul.f32 %v654, %v768
    %v911 = vmul.f32 %v655, %v778
    %v912 = vmul.f32 %v656, %v788
    %v913 = vmul.f32 %v657, %v798
    %v914 = vmul.f32 %v658, %v808
    %v915 = vmul.f32 %v659, %v818
    %v916 = vmul.f32 %v660, %v828
    %v917 = vmul.f32 %v661, %v838
    %v918 = vmul.f32 %v662, %v848
    %v919 = vmul.f32 %v663, %v858
    %v920 = vmul.f32 %v664, %v868
    %v921 = vmul.f32 %v665, %v878
    %v922 = vmul.f32 %v666, %v888
    %v923 = vmul.f32 %v667, %v898
    %v924 = vmul.f32 %v668, %v908
    %v925 = vperm.slane %v82, 0
    %v926 = vmul.f32 %v909, %v925
    %v927 = vmul.f32 %v910, %v925
    %v928 = vmul.f32 %v911, %v925
    %v929 = vmul.f32 %v912, %v925
    %v930 = vmul.f32 %v913, %v925
    %v931 = vmul.f32 %v914, %v925
    %v932 = vmul.f32 %v915, %v925
    %v933 = vmul.f32 %v916, %v925
    %v934 = vmul.f32 %v917, %v925
    %v935 = vmul.f32 %v918, %v925
    %v936 = vmul.f32 %v919, %v925
    %v937 = vmul.f32 %v920, %v925
    %v938 = vmul.f32 %v921, %v925
    %v939 = vmul.f32 %v922, %v925
    %v940 = vmul.f32 %v923, %v925
    %v941 = vmul.f32 %v924, %v925
    %v942 = vperm.slane %v82, 1
    %v943 = vadd.f32 %v926, %v942
    %v944 = vadd.f32 %v927, %v942
    %v945 = vadd.f32 %v928, %v942
    %v946 = vadd.f32 %v929, %v942
    %v947 = vadd.f32 %v930, %v942
    %v948 = vadd.f32 %v931, %v942
    %v949 = vadd.f32 %v932, %v942
    %v950 = vadd.f32 %v933, %v942
    %v951 = vadd.f32 %v934, %v942
    %v952 = vadd.f32 %v935, %v942
    %v953 = vadd.f32 %v936, %v942
    %v954 = vadd.f32 %v937, %v942
    %v955 = vadd.f32 %v938, %v942
    %v956 = vadd.f32 %v939, %v942
    %v957 = vadd.f32 %v940, %v942
    %v958 = vadd.f32 %v941, %v942
    %v959 = vpack.c.bf16 %v943, %v943
    %v960 = vpack.c.bf16 %v944, %v944
    %v961 = vpack.c.bf16 %v945, %v945
    %v962 = vpack.c.bf16 %v946, %v946
    %v963 = vpack.c.bf16 %v947, %v947
    %v964 = vpack.c.bf16 %v948, %v948
    %v965 = vpack.c.bf16 %v949, %v949
    %v966 = vpack.c.bf16 %v950, %v950
    %v967 = vpack.c.bf16 %v951, %v951
    %v968 = vpack.c.bf16 %v952, %v952
    %v969 = vpack.c.bf16 %v953, %v953
    %v970 = vpack.c.bf16 %v954, %v954
    %v971 = vpack.c.bf16 %v955, %v955
    %v972 = vpack.c.bf16 %v956, %v956
    %v973 = vpack.c.bf16 %v957, %v957
    %v974 = vpack.c.bf16 %v958, %v958
    %975 = vst [vmem:[#allocation7] sm:$0xf] %v959
    %976 = vst [vmem:[#allocation7 + $0x4] sm:$0xf] %v960
    %977 = vst [vmem:[#allocation7 + $0x8] sm:$0xf] %v961
    %978 = vst [vmem:[#allocation7 + $0xc] sm:$0xf] %v962
    %979 = vst [vmem:[#allocation7 + $0x10] sm:$0xf] %v963
    %980 = vst [vmem:[#allocation7 + $0x14] sm:$0xf] %v964
    %981 = vst [vmem:[#allocation7 + $0x18] sm:$0xf] %v965
    %982 = vst [vmem:[#allocation7 + $0x1c] sm:$0xf] %v966
    %983 = vst [vmem:[#allocation7 + $0x20] sm:$0xf] %v967
    %984 = vst [vmem:[#allocation7 + $0x24] sm:$0xf] %v968
    %985 = vst [vmem:[#allocation7 + $0x28] sm:$0xf] %v969
    %986 = vst [vmem:[#allocation7 + $0x2c] sm:$0xf] %v970
    %987 = vst [vmem:[#allocation7 + $0x30] sm:$0xf] %v971
    %988 = vst [vmem:[#allocation7 + $0x34] sm:$0xf] %v972
    %989 = vst [vmem:[#allocation7 + $0x38] sm:$0xf] %v973
    %990 = vst [vmem:[#allocation7 + $0x3c] sm:$0xf] %v974
    // Predicated region
    $region26: #{tpu_custom_call.1} parent=1 // pred_check
      _
    $region27: #{tpu_custom_call.1} parent=1 // pred_check_branch
      %992 = sbr.rel (0) target = $region29
    $region28: #{tpu_custom_call.1} parent=1 // pred_region
      %994 = vsyncadd [#allocation4], 0
      %s995 = sshll.u32 [#allocation7], 4
      %s996 = int_to_ptr.vmem [resolvable:$true] %s995
      %s997 = sshll.u32 %s4, 4
      %s998 = int_to_ptr.hbm [resolvable:$true] %s997
      %1003 = dma.vmem_to_hbm [thread:$0]  %s996, 1024, %s998, [#allocation4], 64, 64, 4
    $region29: #{tpu_custom_call.1} parent=1 // pred_fallthru
      _
    // Predicated region
    $region30: #{tpu_custom_call.1} parent=1 // pred_check
      _
    $region31: #{tpu_custom_call.1} parent=1 // pred_check_branch
      %1005 = sbr.rel (0) target = $region33
    $region32: #{tpu_custom_call.1} parent=1 // pred_region
      %1007 = dma.done [#allocation4], 1024
    $region33: #{tpu_custom_call.1} parent=1 // pred_fallthru
      _
    %1008 = vsyncpa [#allocation3], 1
    %1009 = vsyncpa [#allocation6], 1
    %1010 = vsyncpa [#allocation4], 1

</llo_original>
